<compile_context>
chip_gen: v6e
topology: v6e:2x2x1
jax: 0.10.0
libtpu: 0.0.40
codegen_flags: <defaults>
</compile_context>

<pallas_src>
import math

import jax
import jax.numpy as jnp
from jax import lax
from jax.experimental import pallas as pl
from jax.experimental.pallas import tpu as pltpu

# ----- small synthetic shapes consistent with SALGL.forward -----
B = 2          # batch
CIN = 3        # image channels
H = W = 4      # spatial (stand-in for the 14x14 backbone output)
FEAT = 32      # feat_dim     (2048 in the reference model)
NSCENE = 6     # num_scenes
NCLS = 8       # num_classes  (80 in the reference model)
DIN = 16       # label-embedding dim (in_channels=300 in the reference model)
HID = 32       # gc1 hidden   (1024 in the reference model)
EPS = 1e-7
LEAK = 0.2

# lane-dense padded extents (class / scene axes live on the 128-wide lane axis)
CPAD = ((NCLS + 127) // 128) * 128       # 128
SPAD = ((NSCENE + 127) // 128) * 128     # 128

# entropy of the uniform scene distribution (module: self.max_en), a constant
MAX_EN = -float(NSCENE) * (1.0 / NSCENE) * math.log(1.0 / NSCENE + EPS)


# ---------------------------------------------------------------------------
# Single fused kernel
# ---------------------------------------------------------------------------
def salgl_kernel(x_ref, wc_ref, bc_ref, ws_ref, comatT_ref, inp_ref,
                 w1_ref, w2t_ref, stats_ref, comatsT_ref, out_ref):
    f32 = jnp.float32

    # ---- backbone stand-in: 1x1 conv as CIN VPU broadcast MACs + ReLU + ----
    # ---- global spatial max pool (MXU with K=3 would be ~2% utilized)  ----
    x = x_ref[...]                                           # (B, H*W, CIN)
    feat = x[:, :, 0:1] * wc_ref[0:1, :]
    for c in range(1, CIN):                                  # CIN=3, static
        feat = feat + x[:, :, c:c + 1] * wc_ref[c:c + 1, :]
    feat = jnp.maximum(feat + bc_ref[...], 0.0)              # (B, H*W, FEAT)
    img = jnp.max(feat, axis=1)                              # (B, FEAT)

    # ---- scene head: linear + masked softmax + entropies + argmax ----
    scores = jnp.dot(img, ws_ref[...], preferred_element_type=f32)  # (B,SPAD)
    scol = lax.broadcasted_iota(jnp.int32, (B, SPAD), 1)
    scores = jnp.where(scol < NSCENE, scores, -1e30)         # mask pad scenes
    smax = jnp.max(scores, axis=-1, keepdims=True)
    sexp = jnp.exp(scores - smax)
    probs = sexp / jnp.sum(sexp, axis=-1, keepdims=True)     # pads exactly 0

    sample_en = -jnp.sum(probs * jnp.log(probs + EPS)) / B
    mean_p = jnp.sum(probs, axis=0, keepdims=True) / B       # (1, SPAD)
    batch_en = MAX_EN + jnp.sum(mean_p * jnp.log(mean_p + EPS))
    entropy_loss = sample_en + batch_en

    # pack scene_probs + scalar loss into one lane-dense (B, SPAD) store
    stats_ref[...] = jnp.where(scol == SPAD - 1, entropy_loss, probs)

    # per-sample argmax scene (first occurrence), kept as (B, 1) int32
    pmax = jnp.max(probs, axis=-1, keepdims=True)
    idx = jnp.min(jnp.where(probs >= pmax, scol, SPAD), axis=-1, keepdims=True)

    # ---- gather the (transposed) co-occurrence matrix of the argmax scene ---
    gat = jnp.zeros((B, CPAD, CPAD), f32)
    for s in range(NSCENE):                                  # NSCENE=6, static
        gat = jnp.where((idx == s)[:, :, None], comatT_ref[s], gat)

    # ---- comatrix2prob, transposed: AT[b,i,j] = comat[b,j,i] / diag[b,j] ----
    ri = lax.broadcasted_iota(jnp.int32, (CPAD, CPAD), 0)
    ci = lax.broadcasted_iota(jnp.int32, (CPAD, CPAD), 1)
    eye = (ri == ci)[None]                                   # (1, CPAD, CPAD)
    diag = jnp.sum(jnp.where(eye, gat, 0.0), axis=1, keepdims=True)  # (B,1,CPAD)
    at = jnp.where(eye, 1.0, gat / (diag + 1e-8))            # (B, CPAD, CPAD)
    comatsT_ref[...] = at                                    # lane-dense store

    # ---- gen_adj, folded:  adj[b,i,j] = d[b,i] * AT[b,i,j] * d[b,j]      ----
    # (adj is never materialized; the d_i row scale commutes with LeakyReLU)
    d = lax.rsqrt(jnp.sum(at, axis=1, keepdims=True))        # (B, 1, CPAD)

    # ---- gc1 support, hoisted: inp @ W1 computed exactly once (bf16 MXU) ----
    s1 = jnp.dot(inp_ref[...], w1_ref[...],
                 preferred_element_type=f32)                 # (CPAD, HID) f32

    # ---- gc2 tail reorder: v = img_feats @ W2^T, shared across the batch ----
    v = jnp.dot(img.astype(jnp.bfloat16), w2t_ref[...],
                preferred_element_type=f32)                  # (B, HID) f32

    # y = LeakyReLU((AT * d_j) @ S1)  ==  x1 / d_i   (d_i > 0)
    m = (at * d).reshape(B * CPAD, CPAD)
    y = jnp.dot(m, s1, preferred_element_type=f32)           # (B*CPAD, HID)
    y = jnp.where(y > 0, y, LEAK * y).reshape(B, CPAD, HID)

    # output[b,i] = d_i * sum_j AT[b,i,j] * d_j^2 * sum_h y[b,j,h] * v[b,h]
    u0 = jnp.sum(y * v[:, None, :], axis=-1)                 # (B, CPAD)
    wgt = (d * d)[:, 0, :] * u0                              # (B, CPAD)
    out0 = jnp.sum(at * wgt[:, None, :], axis=-1)            # (B, CPAD)
    out_ref[...] = d[:, 0, :] * out0                         # lane-dense store


# ---------------------------------------------------------------------------
# Wrapper (layout plumbing only: padding / pre-transposes, then slicing back)
# ---------------------------------------------------------------------------
def salgl_forward(x_nchw, inp, params):
    f32 = jnp.float32
    # NCHW -> (B, H*W, CIN)
    x_flat = jnp.transpose(x_nchw, (0, 2, 3, 1)).reshape(B, H * W, CIN)
    # pad the scene axis to SPAD lanes (zeros; masked to -inf before softmax)
    ws_pad = jnp.zeros((FEAT, SPAD), f32).at[:, :NSCENE].set(params["Ws"])
    # pre-transpose + zero-pad the comatrix so the kernel works with A^T only
    comat_t = jnp.zeros((NSCENE, CPAD, CPAD), f32).at[:, :NCLS, :NCLS].set(
        jnp.swapaxes(params["comatrix"], 1, 2))
    # label embeddings: pad class rows, feed bf16 to the MXU
    inp_pad = jnp.zeros((CPAD, DIN), jnp.bfloat16).at[:NCLS, :].set(
        inp.astype(jnp.bfloat16))

    stats, comats_t, out_pad = pl.pallas_call(
        salgl_kernel,
        out_shape=(jax.ShapeDtypeStruct((B, SPAD), f32),
                   jax.ShapeDtypeStruct((B, CPAD, CPAD), f32),
                   jax.ShapeDtypeStruct((B, CPAD), f32)),
        compiler_params=pltpu.CompilerParams(
            vmem_limit_bytes=32 * 1024 * 1024),
    )(x_flat, params["Wc"], params["bc"], ws_pad, comat_t, inp_pad,
      params["W1"], params["W2T"])

    scene_probs = stats[:, :NSCENE]
    entropy_loss = stats[0, SPAD - 1]
    comats = jnp.swapaxes(comats_t, 1, 2)[:, :NCLS, :NCLS]
    output = out_pad[:, :NCLS]
    return {"output": output, "scene_probs": scene_probs,
            "entropy_loss": entropy_loss, "comat": comats}


# ---------------------------------------------------------------------------
# Pure-JAX reference (module semantics, for validation)
# ---------------------------------------------------------------------------
def reference_forward(x_nchw, inp, params):
    hi = lax.Precision.HIGHEST
    x = jnp.transpose(x_nchw, (0, 2, 3, 1)).reshape(B, H * W, CIN)
    feat = x[:, :, 0:1] * params["Wc"][0:1, :]
    for c in range(1, CIN):
        feat = feat + x[:, :, c:c + 1] * params["Wc"][c:c + 1, :]
    feat = jnp.maximum(feat + params["bc"], 0.0)
    img_feats = jnp.max(feat, axis=1)

    scores = jnp.dot(img_feats, params["Ws"], precision=hi)
    probs = jax.nn.softmax(scores, axis=-1)
    ent = lambda p: -jnp.sum(p * jnp.log(p + EPS), axis=-1)
    sample_en = jnp.mean(ent(probs))
    batch_en = MAX_EN - ent(jnp.mean(probs, axis=0))
    entropy_loss = sample_en + batch_en

    comat = params["comatrix"]
    diag = jnp.diagonal(comat, axis1=1, axis2=2)[..., None]
    eye = jnp.eye(NCLS, dtype=bool)
    comat_p = jnp.where(eye, 1.0, comat / (diag + 1e-8))
    comats = comat_p[jnp.argmax(probs, axis=-1)]

    d = jnp.power(jnp.sum(comats, axis=2), -0.5)
    dmat = jax.vmap(jnp.diag)(d)
    ad = jnp.einsum("bij,bjk->bik", comats, dmat, precision=hi)
    adjs = jnp.einsum("bij,bjk->bik", jnp.swapaxes(ad, 1, 2), dmat, precision=hi)

    w1 = params["W1"].astype(jnp.float32)                     # stored bf16
    w2 = params["W2T"].astype(jnp.float32).T                  # (HID, FEAT)
    inp_b = inp.astype(jnp.bfloat16).astype(jnp.float32)      # kernel feeds bf16
    img_b = img_feats.astype(jnp.bfloat16).astype(jnp.float32)

    x1 = jnp.einsum("bij,jk->bik", adjs, jnp.dot(inp_b, w1, precision=hi),
                    precision=hi)
    x1 = jnp.where(x1 > 0, x1, LEAK * x1)
    x2 = jnp.einsum("bij,bjf->bif", adjs,
                    jnp.einsum("bik,kf->bif", x1, w2, precision=hi),
                    precision=hi)
    output = jnp.einsum("bif,bf->bi", x2, img_b, precision=hi)
    return {"output": output, "scene_probs": probs,
            "entropy_loss": entropy_loss, "comat": comats}


if __name__ == "__main__":
    key = jax.random.PRNGKey(0)
    ks = jax.random.split(key, 8)
    params = {
        "Wc": jax.random.normal(ks[0], (CIN, FEAT), jnp.float32) * (2.0 / CIN) ** 0.5,
        "bc": jnp.zeros((1, FEAT), jnp.float32),
        "Ws": jax.random.normal(ks[1], (FEAT, NSCENE), jnp.float32) * (2.0 / FEAT) ** 0.5,
        # large GCN weights stored in bf16; W2 pre-transposed to (FEAT, HID)
        "W1": (jax.random.uniform(ks[2], (DIN, HID), jnp.float32, -1.0, 1.0)
               / (HID ** 0.5)).astype(jnp.bfloat16),
        "W2T": (jax.random.uniform(ks[3], (HID, FEAT), jnp.float32, -1.0, 1.0)
                / (FEAT ** 0.5)).T.astype(jnp.bfloat16),
        # co-occurrence buffer: deterministic positive counts
        "comatrix": jax.random.uniform(ks[4], (NSCENE, NCLS, NCLS), jnp.float32, 0.5, 5.0),
    }
    x = jax.random.normal(ks[5], (B, CIN, H, W), jnp.float32)   # NCHW like torch
    inp = jax.random.normal(ks[6], (NCLS, DIN), jnp.float32)    # label embeddings

    out = jax.jit(salgl_forward)(x, inp, params)
    jax.block_until_ready(out)

    ref = reference_forward(x, inp, params)
    assert jnp.allclose(out["scene_probs"], ref["scene_probs"],
                        rtol=1e-4, atol=1e-4), "scene_probs"
    assert jnp.allclose(out["entropy_loss"], ref["entropy_loss"],
                        rtol=1e-4, atol=1e-4), "entropy_loss"
    assert jnp.allclose(out["comat"], ref["comat"],
                        rtol=1e-4, atol=1e-4), "comat"
    assert jnp.allclose(out["output"], ref["output"],
                        rtol=1e-2, atol=1e-2), "output"

    print("KERNEL_OK")
</pallas_src>

<mosaic_0001>
module attributes {stable_mosaic.version = 11 : i64} {
  func.func @salgl_kernel(%arg0: memref<2x16x3xf32, #tpu.memory_space<vmem>>, %arg1: memref<3x32xf32, #tpu.memory_space<vmem>>, %arg2: memref<1x32xf32, #tpu.memory_space<vmem>>, %arg3: memref<32x128xf32, #tpu.memory_space<vmem>>, %arg4: memref<6x128x128xf32, #tpu.memory_space<vmem>>, %arg5: memref<128x16xbf16, #tpu.memory_space<vmem>>, %arg6: memref<16x32xbf16, #tpu.memory_space<vmem>>, %arg7: memref<32x32xbf16, #tpu.memory_space<vmem>>, %arg8: memref<2x128xf32, #tpu.memory_space<vmem>>, %arg9: memref<2x128x128xf32, #tpu.memory_space<vmem>>, %arg10: memref<2x128xf32, #tpu.memory_space<vmem>>) attributes {dimension_semantics = [], scalar_prefetch = 0 : i64, scratch_operands = 0 : i64, tpu.core_type = #tpu.core_type<tc>} {
    %c0 = arith.constant 0 : index
    %c0_0 = arith.constant 0 : index
    %c0_1 = arith.constant 0 : index
    %0 = vector.load %arg0[%c0, %c0_0, %c0_1] : memref<2x16x3xf32, #tpu.memory_space<vmem>>, vector<2x16x3xf32>
    %1 = vector.extract_strided_slice %0 {offsets = [0, 0, 0], sizes = [2, 16, 1], strides = [1, 1, 1]} : vector<2x16x3xf32> to vector<2x16x1xf32>
    %c0_2 = arith.constant 0 : index
    %c0_3 = arith.constant 0 : index
    %2 = vector.load %arg1[%c0_2, %c0_3] : memref<3x32xf32, #tpu.memory_space<vmem>>, vector<1x32xf32>
    %3 = vector.shape_cast %2 : vector<1x32xf32> to vector<1x1x32xf32>
    %4 = vector.broadcast %1 : vector<2x16x1xf32> to vector<2x16x32xf32>
    %5 = vector.broadcast %3 : vector<1x1x32xf32> to vector<2x16x32xf32>
    %6 = arith.mulf %4, %5 : vector<2x16x32xf32>
    %7 = vector.extract_strided_slice %0 {offsets = [0, 0, 1], sizes = [2, 16, 1], strides = [1, 1, 1]} : vector<2x16x3xf32> to vector<2x16x1xf32>
    %c1 = arith.constant 1 : index
    %c0_4 = arith.constant 0 : index
    %8 = vector.load %arg1[%c1, %c0_4] : memref<3x32xf32, #tpu.memory_space<vmem>>, vector<1x32xf32>
    %9 = vector.shape_cast %8 : vector<1x32xf32> to vector<1x1x32xf32>
    %10 = vector.broadcast %7 : vector<2x16x1xf32> to vector<2x16x32xf32>
    %11 = vector.broadcast %9 : vector<1x1x32xf32> to vector<2x16x32xf32>
    %12 = arith.mulf %10, %11 : vector<2x16x32xf32>
    %13 = arith.addf %6, %12 : vector<2x16x32xf32>
    %14 = vector.extract_strided_slice %0 {offsets = [0, 0, 2], sizes = [2, 16, 1], strides = [1, 1, 1]} : vector<2x16x3xf32> to vector<2x16x1xf32>
    %c2 = arith.constant 2 : index
    %c0_5 = arith.constant 0 : index
    %15 = vector.load %arg1[%c2, %c0_5] : memref<3x32xf32, #tpu.memory_space<vmem>>, vector<1x32xf32>
    %16 = vector.shape_cast %15 : vector<1x32xf32> to vector<1x1x32xf32>
    %17 = vector.broadcast %14 : vector<2x16x1xf32> to vector<2x16x32xf32>
    %18 = vector.broadcast %16 : vector<1x1x32xf32> to vector<2x16x32xf32>
    %19 = arith.mulf %17, %18 : vector<2x16x32xf32>
    %20 = arith.addf %13, %19 : vector<2x16x32xf32>
    %c0_6 = arith.constant 0 : index
    %c0_7 = arith.constant 0 : index
    %21 = vector.load %arg2[%c0_6, %c0_7] : memref<1x32xf32, #tpu.memory_space<vmem>>, vector<1x32xf32>
    %22 = vector.shape_cast %21 : vector<1x32xf32> to vector<1x1x32xf32>
    %23 = vector.broadcast %22 : vector<1x1x32xf32> to vector<2x16x32xf32>
    %24 = arith.addf %20, %23 : vector<2x16x32xf32>
    %cst = arith.constant 0.000000e+00 : f32
    %25 = vector.broadcast %cst : f32 to vector<2x16x32xf32>
    %26 = arith.maximumf %24, %25 : vector<2x16x32xf32>
    %cst_8 = arith.constant dense<0xFF800000> : vector<2x32xf32>
    %27 = vector.multi_reduction <maximumf>, %26, %cst_8 [1] : vector<2x16x32xf32> to vector<2x32xf32>
    %c0_9 = arith.constant 0 : index
    %c0_10 = arith.constant 0 : index
    %28 = vector.load %arg3[%c0_9, %c0_10] : memref<32x128xf32, #tpu.memory_space<vmem>>, vector<32x128xf32>
    %cst_11 = arith.constant dense<0.000000e+00> : vector<2x128xf32>
    %29 = tpu.matmul %27, %28, %cst_11 {dimension_numbers = #tpu.dot_dimension_numbers<[1], [0], [0], [1], [0, 0, 1, 1], [], []>} : vector<2x32xf32>, vector<32x128xf32>, vector<2x128xf32> -> vector<2x128xf32>
    %30 = tpu.iota {dimensions = array<i32: 1>} : vector<2x128xi32>
    %c6_i32 = arith.constant 6 : i32
    %31 = vector.broadcast %c6_i32 : i32 to vector<2x128xi32>
    %32 = arith.cmpi slt, %30, %31 : vector<2x128xi32>
    %cst_12 = arith.constant -1.000000e+30 : f32
    %33 = vector.broadcast %cst_12 : f32 to vector<2x128xf32>
    %34 = arith.select %32, %29, %33 : vector<2x128xi1>, vector<2x128xf32>
    %cst_13 = arith.constant dense<0xFF800000> : vector<2xf32>
    %35 = vector.multi_reduction <maximumf>, %34, %cst_13 [1] : vector<2x128xf32> to vector<2xf32>
    %36 = vector.shape_cast %35 : vector<2xf32> to vector<2x1xf32>
    %37 = vector.broadcast %36 : vector<2x1xf32> to vector<2x128xf32>
    %38 = arith.subf %34, %37 : vector<2x128xf32>
    %39 = math.exp %38 : vector<2x128xf32>
    %cst_14 = arith.constant dense<0.000000e+00> : vector<2xf32>
    %40 = vector.multi_reduction <add>, %39, %cst_14 [1] : vector<2x128xf32> to vector<2xf32>
    %41 = vector.shape_cast %40 : vector<2xf32> to vector<2x1xf32>
    %42 = vector.broadcast %41 : vector<2x1xf32> to vector<2x128xf32>
    %43 = arith.divf %39, %42 : vector<2x128xf32>
    %cst_15 = arith.constant 1.000000e-07 : f32
    %44 = vector.broadcast %cst_15 : f32 to vector<2x128xf32>
    %45 = arith.addf %43, %44 : vector<2x128xf32>
    %46 = math.log %45 : vector<2x128xf32>
    %47 = arith.mulf %43, %46 : vector<2x128xf32>
    %48 = vector.shape_cast %47 : vector<2x128xf32> to vector<1x2x128xf32>
    %cst_16 = arith.constant dense<0.000000e+00> : vector<1xf32>
    %49 = vector.multi_reduction <add>, %48, %cst_16 [1, 2] : vector<1x2x128xf32> to vector<1xf32>
    %50 = vector.shape_cast %49 : vector<1xf32> to vector<1x1x1xf32>
    %51 = vector.extract %50[0, 0, 0] : f32 from vector<1x1x1xf32>
    %cst_17 = arith.constant 0.000000e+00 : f32
    %52 = arith.subf %cst_17, %51 : f32
    %cst_18 = arith.constant 2.000000e+00 : f32
    %53 = arith.divf %52, %cst_18 : f32
    %cst_19 = arith.constant dense<0.000000e+00> : vector<128xf32>
    %54 = vector.multi_reduction <add>, %43, %cst_19 [0] : vector<2x128xf32> to vector<128xf32>
    %55 = vector.shape_cast %54 : vector<128xf32> to vector<1x128xf32>
    %cst_20 = arith.constant 2.000000e+00 : f32
    %56 = vector.broadcast %cst_20 : f32 to vector<1x128xf32>
    %57 = arith.divf %55, %56 : vector<1x128xf32>
    %cst_21 = arith.constant 1.000000e-07 : f32
    %58 = vector.broadcast %cst_21 : f32 to vector<1x128xf32>
    %59 = arith.addf %57, %58 : vector<1x128xf32>
    %60 = math.log %59 : vector<1x128xf32>
    %61 = arith.mulf %57, %60 : vector<1x128xf32>
    %62 = vector.shape_cast %61 : vector<1x128xf32> to vector<1x1x128xf32>
    %cst_22 = arith.constant dense<0.000000e+00> : vector<1xf32>
    %63 = vector.multi_reduction <add>, %62, %cst_22 [1, 2] : vector<1x1x128xf32> to vector<1xf32>
    %64 = vector.shape_cast %63 : vector<1xf32> to vector<1x1x1xf32>
    %65 = vector.extract %64[0, 0, 0] : f32 from vector<1x1x1xf32>
    %cst_23 = arith.constant 1.79175889 : f32
    %66 = arith.addf %cst_23, %65 : f32
    %67 = arith.addf %53, %66 : f32
    %c127_i32 = arith.constant 127 : i32
    %68 = vector.broadcast %c127_i32 : i32 to vector<2x128xi32>
    %69 = arith.cmpi eq, %30, %68 : vector<2x128xi32>
    %70 = vector.broadcast %67 : f32 to vector<2x128xf32>
    %71 = arith.select %69, %70, %43 : vector<2x128xi1>, vector<2x128xf32>
    %c0_24 = arith.constant 0 : index
    %c0_25 = arith.constant 0 : index
    %72 = vector.load %arg8[%c0_24, %c0_25] : memref<2x128xf32, #tpu.memory_space<vmem>>, vector<2x128xf32>
    tpu.vector_store %arg8[%c0_24, %c0_25], %71 {strides = array<i32>} : memref<2x128xf32, #tpu.memory_space<vmem>>, vector<2x128xf32>,
    %cst_26 = arith.constant dense<0xFF800000> : vector<2xf32>
    %73 = vector.multi_reduction <maximumf>, %43, %cst_26 [1] : vector<2x128xf32> to vector<2xf32>
    %74 = vector.shape_cast %73 : vector<2xf32> to vector<2x1xf32>
    %75 = vector.broadcast %74 : vector<2x1xf32> to vector<2x128xf32>
    %76 = arith.cmpf oge, %43, %75 : vector<2x128xf32>
    %c128_i32 = arith.constant 128 : i32
    %77 = vector.broadcast %c128_i32 : i32 to vector<2x128xi32>
    %78 = arith.select %76, %30, %77 : vector<2x128xi1>, vector<2x128xi32>
    %cst_27 = arith.constant dense<2147483647> : vector<2xi32>
    %79 = vector.multi_reduction <minsi>, %78, %cst_27 [1] : vector<2x128xi32> to vector<2xi32>
    %80 = vector.shape_cast %79 : vector<2xi32> to vector<2x1xi32>
    %cst_28 = arith.constant 0.000000e+00 : f32
    %81 = vector.broadcast %cst_28 : f32 to vector<2x128x128xf32>
    %c0_i32 = arith.constant 0 : i32
    %82 = vector.broadcast %c0_i32 : i32 to vector<2x1xi32>
    %83 = arith.cmpi eq, %80, %82 : vector<2x1xi32>
    %84 = vector.shape_cast %83 : vector<2x1xi1> to vector<2x1x1xi1>
    %c0_29 = arith.constant 0 : index
    %c0_30 = arith.constant 0 : index
    %c0_31 = arith.constant 0 : index
    %85 = vector.load %arg4[%c0_29, %c0_30, %c0_31] : memref<6x128x128xf32, #tpu.memory_space<vmem>>, vector<1x128x128xf32>
    %86 = vector.shape_cast %85 : vector<1x128x128xf32> to vector<128x128xf32>
    %87 = vector.shape_cast %84 : vector<2x1x1xi1> to vector<2x1x1xi1>
    %88 = vector.broadcast %87 : vector<2x1x1xi1> to vector<2x128x128xi1>
    %89 = vector.shape_cast %86 : vector<128x128xf32> to vector<1x128x128xf32>
    %90 = vector.broadcast %89 : vector<1x128x128xf32> to vector<2x128x128xf32>
    %91 = arith.select %88, %90, %81 : vector<2x128x128xi1>, vector<2x128x128xf32>
    %c1_i32 = arith.constant 1 : i32
    %92 = vector.broadcast %c1_i32 : i32 to vector<2x1xi32>
    %93 = arith.cmpi eq, %80, %92 : vector<2x1xi32>
    %94 = vector.shape_cast %93 : vector<2x1xi1> to vector<2x1x1xi1>
    %c1_32 = arith.constant 1 : index
    %c0_33 = arith.constant 0 : index
    %c0_34 = arith.constant 0 : index
    %95 = vector.load %arg4[%c1_32, %c0_33, %c0_34] : memref<6x128x128xf32, #tpu.memory_space<vmem>>, vector<1x128x128xf32>
    %96 = vector.shape_cast %95 : vector<1x128x128xf32> to vector<128x128xf32>
    %97 = vector.shape_cast %94 : vector<2x1x1xi1> to vector<2x1x1xi1>
    %98 = vector.broadcast %97 : vector<2x1x1xi1> to vector<2x128x128xi1>
    %99 = vector.shape_cast %96 : vector<128x128xf32> to vector<1x128x128xf32>
    %100 = vector.broadcast %99 : vector<1x128x128xf32> to vector<2x128x128xf32>
    %101 = arith.select %98, %100, %91 : vector<2x128x128xi1>, vector<2x128x128xf32>
    %c2_i32 = arith.constant 2 : i32
    %102 = vector.broadcast %c2_i32 : i32 to vector<2x1xi32>
    %103 = arith.cmpi eq, %80, %102 : vector<2x1xi32>
    %104 = vector.shape_cast %103 : vector<2x1xi1> to vector<2x1x1xi1>
    %c2_35 = arith.constant 2 : index
    %c0_36 = arith.constant 0 : index
    %c0_37 = arith.constant 0 : index
    %105 = vector.load %arg4[%c2_35, %c0_36, %c0_37] : memref<6x128x128xf32, #tpu.memory_space<vmem>>, vector<1x128x128xf32>
    %106 = vector.shape_cast %105 : vector<1x128x128xf32> to vector<128x128xf32>
    %107 = vector.shape_cast %104 : vector<2x1x1xi1> to vector<2x1x1xi1>
    %108 = vector.broadcast %107 : vector<2x1x1xi1> to vector<2x128x128xi1>
    %109 = vector.shape_cast %106 : vector<128x128xf32> to vector<1x128x128xf32>
    %110 = vector.broadcast %109 : vector<1x128x128xf32> to vector<2x128x128xf32>
    %111 = arith.select %108, %110, %101 : vector<2x128x128xi1>, vector<2x128x128xf32>
    %c3_i32 = arith.constant 3 : i32
    %112 = vector.broadcast %c3_i32 : i32 to vector<2x1xi32>
    %113 = arith.cmpi eq, %80, %112 : vector<2x1xi32>
    %114 = vector.shape_cast %113 : vector<2x1xi1> to vector<2x1x1xi1>
    %c3 = arith.constant 3 : index
    %c0_38 = arith.constant 0 : index
    %c0_39 = arith.constant 0 : index
    %115 = vector.load %arg4[%c3, %c0_38, %c0_39] : memref<6x128x128xf32, #tpu.memory_space<vmem>>, vector<1x128x128xf32>
    %116 = vector.shape_cast %115 : vector<1x128x128xf32> to vector<128x128xf32>
    %117 = vector.shape_cast %114 : vector<2x1x1xi1> to vector<2x1x1xi1>
    %118 = vector.broadcast %117 : vector<2x1x1xi1> to vector<2x128x128xi1>
    %119 = vector.shape_cast %116 : vector<128x128xf32> to vector<1x128x128xf32>
    %120 = vector.broadcast %119 : vector<1x128x128xf32> to vector<2x128x128xf32>
    %121 = arith.select %118, %120, %111 : vector<2x128x128xi1>, vector<2x128x128xf32>
    %c4_i32 = arith.constant 4 : i32
    %122 = vector.broadcast %c4_i32 : i32 to vector<2x1xi32>
    %123 = arith.cmpi eq, %80, %122 : vector<2x1xi32>
    %124 = vector.shape_cast %123 : vector<2x1xi1> to vector<2x1x1xi1>
    %c4 = arith.constant 4 : index
    %c0_40 = arith.constant 0 : index
    %c0_41 = arith.constant 0 : index
    %125 = vector.load %arg4[%c4, %c0_40, %c0_41] : memref<6x128x128xf32, #tpu.memory_space<vmem>>, vector<1x128x128xf32>
    %126 = vector.shape_cast %125 : vector<1x128x128xf32> to vector<128x128xf32>
    %127 = vector.shape_cast %124 : vector<2x1x1xi1> to vector<2x1x1xi1>
    %128 = vector.broadcast %127 : vector<2x1x1xi1> to vector<2x128x128xi1>
    %129 = vector.shape_cast %126 : vector<128x128xf32> to vector<1x128x128xf32>
    %130 = vector.broadcast %129 : vector<1x128x128xf32> to vector<2x128x128xf32>
    %131 = arith.select %128, %130, %121 : vector<2x128x128xi1>, vector<2x128x128xf32>
    %c5_i32 = arith.constant 5 : i32
    %132 = vector.broadcast %c5_i32 : i32 to vector<2x1xi32>
    %133 = arith.cmpi eq, %80, %132 : vector<2x1xi32>
    %134 = vector.shape_cast %133 : vector<2x1xi1> to vector<2x1x1xi1>
    %c5 = arith.constant 5 : index
    %c0_42 = arith.constant 0 : index
    %c0_43 = arith.constant 0 : index
    %135 = vector.load %arg4[%c5, %c0_42, %c0_43] : memref<6x128x128xf32, #tpu.memory_space<vmem>>, vector<1x128x128xf32>
    %136 = vector.shape_cast %135 : vector<1x128x128xf32> to vector<128x128xf32>
    %137 = vector.shape_cast %134 : vector<2x1x1xi1> to vector<2x1x1xi1>
    %138 = vector.broadcast %137 : vector<2x1x1xi1> to vector<2x128x128xi1>
    %139 = vector.shape_cast %136 : vector<128x128xf32> to vector<1x128x128xf32>
    %140 = vector.broadcast %139 : vector<1x128x128xf32> to vector<2x128x128xf32>
    %141 = arith.select %138, %140, %131 : vector<2x128x128xi1>, vector<2x128x128xf32>
    %142 = tpu.iota {dimensions = array<i32: 0>} : vector<128x128xi32>
    %143 = tpu.iota {dimensions = array<i32: 1>} : vector<128x128xi32>
    %144 = arith.cmpi eq, %142, %143 : vector<128x128xi32>
    %145 = vector.shape_cast %144 : vector<128x128xi1> to vector<1x128x128xi1>
    %cst_44 = arith.constant 0.000000e+00 : f32
    %146 = vector.shape_cast %145 : vector<1x128x128xi1> to vector<1x128x128xi1>
    %147 = vector.broadcast %146 : vector<1x128x128xi1> to vector<2x128x128xi1>
    %148 = vector.broadcast %cst_44 : f32 to vector<2x128x128xf32>
    %149 = arith.select %147, %141, %148 : vector<2x128x128xi1>, vector<2x128x128xf32>
    %cst_45 = arith.constant dense<0.000000e+00> : vector<2x128xf32>
    %150 = vector.multi_reduction <add>, %149, %cst_45 [1] : vector<2x128x128xf32> to vector<2x128xf32>
    %151 = vector.shape_cast %150 : vector<2x128xf32> to vector<2x1x128xf32>
    %cst_46 = arith.constant 9.99999993E-9 : f32
    %152 = vector.broadcast %cst_46 : f32 to vector<2x1x128xf32>
    %153 = arith.addf %151, %152 : vector<2x1x128xf32>
    %154 = vector.broadcast %153 : vector<2x1x128xf32> to vector<2x128x128xf32>
    %155 = arith.divf %141, %154 : vector<2x128x128xf32>
    %cst_47 = arith.constant 1.000000e+00 : f32
    %156 = vector.shape_cast %145 : vector<1x128x128xi1> to vector<1x128x128xi1>
    %157 = vector.broadcast %156 : vector<1x128x128xi1> to vector<2x128x128xi1>
    %158 = vector.broadcast %cst_47 : f32 to vector<2x128x128xf32>
    %159 = arith.select %157, %158, %155 : vector<2x128x128xi1>, vector<2x128x128xf32>
    %c0_48 = arith.constant 0 : index
    %c0_49 = arith.constant 0 : index
    %c0_50 = arith.constant 0 : index
    %160 = vector.load %arg9[%c0_48, %c0_49, %c0_50] : memref<2x128x128xf32, #tpu.memory_space<vmem>>, vector<2x128x128xf32>
    tpu.vector_store %arg9[%c0_48, %c0_49, %c0_50], %159 {strides = array<i32>} : memref<2x128x128xf32, #tpu.memory_space<vmem>>, vector<2x128x128xf32>,
    %cst_51 = arith.constant dense<0.000000e+00> : vector<2x128xf32>
    %161 = vector.multi_reduction <add>, %159, %cst_51 [1] : vector<2x128x128xf32> to vector<2x128xf32>
    %162 = vector.shape_cast %161 : vector<2x128xf32> to vector<2x1x128xf32>
    %163 = math.rsqrt %162 : vector<2x1x128xf32>
    %c0_52 = arith.constant 0 : index
    %c0_53 = arith.constant 0 : index
    %164 = vector.load %arg5[%c0_52, %c0_53] : memref<128x16xbf16, #tpu.memory_space<vmem>>, vector<128x16xbf16>
    %c0_54 = arith.constant 0 : index
    %c0_55 = arith.constant 0 : index
    %165 = vector.load %arg6[%c0_54, %c0_55] : memref<16x32xbf16, #tpu.memory_space<vmem>>, vector<16x32xbf16>
    %cst_56 = arith.constant dense<0.000000e+00> : vector<128x32xf32>
    %166 = tpu.matmul %164, %165, %cst_56 {dimension_numbers = #tpu.dot_dimension_numbers<[1], [0], [0], [1], [0, 0, 1, 1], [], []>} : vector<128x16xbf16>, vector<16x32xbf16>, vector<128x32xf32> -> vector<128x32xf32>
    %167 = arith.truncf %27 : vector<2x32xf32> to vector<2x32xbf16>
    %c0_57 = arith.constant 0 : index
    %c0_58 = arith.constant 0 : index
    %168 = vector.load %arg7[%c0_57, %c0_58] : memref<32x32xbf16, #tpu.memory_space<vmem>>, vector<32x32xbf16>
    %cst_59 = arith.constant dense<0.000000e+00> : vector<2x32xf32>
    %169 = tpu.matmul %167, %168, %cst_59 {dimension_numbers = #tpu.dot_dimension_numbers<[1], [0], [0], [1], [0, 0, 1, 1], [], []>} : vector<2x32xbf16>, vector<32x32xbf16>, vector<2x32xf32> -> vector<2x32xf32>
    %170 = vector.broadcast %163 : vector<2x1x128xf32> to vector<2x128x128xf32>
    %171 = arith.mulf %159, %170 : vector<2x128x128xf32>
    %172 = vector.shape_cast %171 : vector<2x128x128xf32> to vector<256x128xf32>
    %cst_60 = arith.constant dense<0.000000e+00> : vector<256x32xf32>
    %173 = tpu.matmul %172, %166, %cst_60 {dimension_numbers = #tpu.dot_dimension_numbers<[1], [0], [0], [1], [0, 0, 1, 1], [], []>} : vector<256x128xf32>, vector<128x32xf32>, vector<256x32xf32> -> vector<256x32xf32>
    %cst_61 = arith.constant 0.000000e+00 : f32
    %174 = vector.broadcast %cst_61 : f32 to vector<256x32xf32>
    %175 = arith.cmpf ogt, %173, %174 : vector<256x32xf32>
    %cst_62 = arith.constant 2.000000e-01 : f32
    %176 = vector.broadcast %cst_62 : f32 to vector<256x32xf32>
    %177 = arith.mulf %176, %173 : vector<256x32xf32>
    %178 = arith.select %175, %173, %177 : vector<256x32xi1>, vector<256x32xf32>
    %179 = vector.shape_cast %178 : vector<256x32xf32> to vector<2x128x32xf32>
    %180 = vector.shape_cast %169 : vector<2x32xf32> to vector<2x1x32xf32>
    %181 = vector.broadcast %180 : vector<2x1x32xf32> to vector<2x128x32xf32>
    %182 = arith.mulf %179, %181 : vector<2x128x32xf32>
    %cst_63 = arith.constant dense<0.000000e+00> : vector<2x128xf32>
    %183 = vector.multi_reduction <add>, %182, %cst_63 [2] : vector<2x128x32xf32> to vector<2x128xf32>
    %184 = arith.mulf %163, %163 : vector<2x1x128xf32>
    %185 = vector.shape_cast %184 : vector<2x1x128xf32> to vector<2x128xf32>
    %186 = arith.mulf %185, %183 : vector<2x128xf32>
    %187 = vector.shape_cast %186 : vector<2x128xf32> to vector<2x1x128xf32>
    %188 = vector.broadcast %187 : vector<2x1x128xf32> to vector<2x128x128xf32>
    %189 = arith.mulf %159, %188 : vector<2x128x128xf32>
    %cst_64 = arith.constant dense<0.000000e+00> : vector<2x128xf32>
    %190 = vector.multi_reduction <add>, %189, %cst_64 [2] : vector<2x128x128xf32> to vector<2x128xf32>
    %191 = vector.shape_cast %163 : vector<2x1x128xf32> to vector<2x128xf32>
    %192 = arith.mulf %191, %190 : vector<2x128xf32>
    %c0_65 = arith.constant 0 : index
    %c0_66 = arith.constant 0 : index
    %193 = vector.load %arg10[%c0_65, %c0_66] : memref<2x128xf32, #tpu.memory_space<vmem>>, vector<2x128xf32>
    tpu.vector_store %arg10[%c0_65, %c0_66], %192 {strides = array<i32>} : memref<2x128xf32, #tpu.memory_space<vmem>>, vector<2x128xf32>,
    return
  }
}

</mosaic_0001>

<llo_original>
// kernel: salgl_forward.1
$region0: #{salgl_forward.1}
  #allocation0 [shape = 'u32[]', space=smem, size = 0x4, offset = 0x4, fixed_abs, tag = 'smem constant byte address 0x4 - core index']
  #allocation1 [shape = 'u32[144,128]{1,0:T(1,128)}', space=vmem, size = 0x12000, scoped, tag = 'internal scratch']
  %s0 = inlined_call_operand.vmem [shape: f32[2,16,3], index: 0, kind: input, shape index: {}]
  %s1 = inlined_call_operand.vmem [shape: f32[3,32], index: 1, kind: input, shape index: {}]
  %s2 = inlined_call_operand.vmem [shape: f32[1,32], index: 2, kind: input, shape index: {}]
  %s3 = inlined_call_operand.vmem [shape: f32[32,128], index: 3, kind: input, shape index: {}]
  %s4 = inlined_call_operand.vmem [shape: f32[6,128,128], index: 4, kind: input, shape index: {}]
  %s5 = inlined_call_operand.vmem [shape: bf16[128,16], index: 5, kind: input, shape index: {}]
  %s6 = inlined_call_operand.vmem [shape: bf16[16,32], index: 6, kind: input, shape index: {}]
  %s7 = inlined_call_operand.vmem [shape: bf16[32,32], index: 7, kind: input, shape index: {}]
  %s8 = inlined_call_operand.vmem [shape: f32[2,128], index: 8, kind: output, shape index: {0}]
  %s9 = inlined_call_operand.vmem [shape: f32[2,128,128], index: 9, kind: output, shape index: {1}]
  %s10 = inlined_call_operand.hbm [shape: f32[2,128], index: 10, kind: output, shape index: {2}]
  %11 = xla_tuple %s8, %s9, %s10
  %s12 = sld [smem:[#allocation0]]
  $region58: #{salgl_forward.1} parent=0
    _
  %s14 = ssub.s32 1, %s12
  %s15 = scalar_select 0, %s14, %s12
  $region1: #{salgl_forward.1} parent=0
    #allocation2 [shape = 'u8[1024]{0}', space=vmem, size = 0x400, scoped, tag = 'output window, operand 2, single buffered']
    #allocation3 [shape = 's32[1]{0}', space=sflag, size = 0x4, scoped, tag = 'scoped memory for salgl_forward.1']
    %16 = vsyncpa [#allocation3], 0
    // Predicated region
    $region2: #{salgl_forward.1} parent=1 // pred_check
      _
    $region3: #{salgl_forward.1} parent=1 // pred_check_branch
      %18 = sbr.rel (0) target = $region5
    $region4: #{salgl_forward.1} parent=1 // pred_region
      _
    $region5: #{salgl_forward.1} parent=1 // pred_fallthru
      _
    // Predicated region
    $region6: #{salgl_forward.1} parent=1 // pred_check
      _
    $region7: #{salgl_forward.1} parent=1 // pred_check_branch
      %20 = sbr.rel (0) target = $region9
    $region8: #{salgl_forward.1} parent=1 // pred_region
      _
    $region9: #{salgl_forward.1} parent=1 // pred_fallthru
      _
    // Predicated region
    $region10: #{salgl_forward.1} parent=1 // pred_check
      _
    $region11: #{salgl_forward.1} parent=1 // pred_check_branch
      %22 = sbr.rel (0) target = $region13
    $region12: #{salgl_forward.1} parent=1 // pred_region
      _
    $region13: #{salgl_forward.1} parent=1 // pred_fallthru
      _
    // Predicated region
    $region14: #{salgl_forward.1} parent=1 // pred_check
      _
    $region15: #{salgl_forward.1} parent=1 // pred_check_branch
      %24 = sbr.rel (0) target = $region17
    $region16: #{salgl_forward.1} parent=1 // pred_region
      _
    $region17: #{salgl_forward.1} parent=1 // pred_fallthru
      _
    // Predicated region
    $region18: #{salgl_forward.1} parent=1 // pred_check
      _
    $region19: #{salgl_forward.1} parent=1 // pred_check_branch
      %26 = sbr.rel (0) target = $region21
    $region20: #{salgl_forward.1} parent=1 // pred_region
      _
    $region21: #{salgl_forward.1} parent=1 // pred_fallthru
      _
    // Predicated region
    $region22: #{salgl_forward.1} parent=1 // pred_check
      _
    $region23: #{salgl_forward.1} parent=1 // pred_check_branch
      %28 = sbr.rel (0) target = $region25
    $region24: #{salgl_forward.1} parent=1 // pred_region
      _
    $region25: #{salgl_forward.1} parent=1 // pred_fallthru
      _
    // Predicated region
    $region26: #{salgl_forward.1} parent=1 // pred_check
      _
    $region27: #{salgl_forward.1} parent=1 // pred_check_branch
      %30 = sbr.rel (0) target = $region29
    $region28: #{salgl_forward.1} parent=1 // pred_region
      _
    $region29: #{salgl_forward.1} parent=1 // pred_fallthru
      _
    // Predicated region
    $region30: #{salgl_forward.1} parent=1 // pred_check
      _
    $region31: #{salgl_forward.1} parent=1 // pred_check_branch
      %32 = sbr.rel (0) target = $region33
    $region32: #{salgl_forward.1} parent=1 // pred_region
      _
    $region33: #{salgl_forward.1} parent=1 // pred_fallthru
      _
    %v34 = vld [vmem:[%s0] sm:$0xff]
    %v35 = vld [vmem:[%s0 + $0x8] sm:$0xff]
    %v36 = vld [vmem:[%s0 + $0x10] sm:$0xff]
    %v37 = vld [vmem:[%s0 + $0x18] sm:$0xff]
    %v38 = vld [vmem:[%s1] sm:$0x1]
    %40 = vset.pattern.permute.xlu0 0
    %41 = vperm.xlu0 %40, %v34
    %v42 = vpop.permute.xlu0 %41
    %45 = vset.pattern.permute.xlu0 0
    %46 = vperm.xlu0 %45, %v35
    %v47 = vpop.permute.xlu0 %46
    %50 = vset.pattern.permute.xlu0 0
    %51 = vperm.xlu0 %50, %v36
    %v52 = vpop.permute.xlu0 %51
    %55 = vset.pattern.permute.xlu0 0
    %56 = vperm.xlu0 %55, %v37
    %v57 = vpop.permute.xlu0 %56
    %v59 = vlaneseq
    %v60 = vshrl.u32 %v59, 7
    %v61 = vsub.s32 0, %v60
    %v62 = vrot.slane %v38, %v61
    %v63 = vmul.f32 %v42, %v62
    %v64 = vmul.f32 %v47, %v62
    %v65 = vmul.f32 %v52, %v62
    %v66 = vmul.f32 %v57, %v62
    %v67 = vld [vmem:[%s1 + $0x1] sm:$0x1]
    %68 = vset.pattern.permute.xlu0 1
    %69 = vperm.xlu0 %68, %v34
    %v70 = vpop.permute.xlu0 %69
    %72 = vset.pattern.permute.xlu0 1
    %73 = vperm.xlu0 %72, %v35
    %v74 = vpop.permute.xlu0 %73
    %76 = vset.pattern.permute.xlu0 1
    %77 = vperm.xlu0 %76, %v36
    %v78 = vpop.permute.xlu0 %77
    %80 = vset.pattern.permute.xlu0 1
    %81 = vperm.xlu0 %80, %v37
    %v82 = vpop.permute.xlu0 %81
    %v84 = vlaneseq
    %v85 = vshrl.u32 %v84, 7
    %v86 = vsub.s32 0, %v85
    %v87 = vrot.slane %v67, %v86
    %v88 = vmul.f32 %v70, %v87
    %v89 = vmul.f32 %v74, %v87
    %v90 = vmul.f32 %v78, %v87
    %v91 = vmul.f32 %v82, %v87
    %v92 = vadd.f32 %v63, %v88
    %v93 = vadd.f32 %v64, %v89
    %v94 = vadd.f32 %v65, %v90
    %v95 = vadd.f32 %v66, %v91
    %v96 = vld [vmem:[%s1 + $0x2] sm:$0x1]
    %97 = vset.pattern.permute.xlu0 2
    %98 = vperm.xlu0 %97, %v34
    %v99 = vpop.permute.xlu0 %98
    %101 = vset.pattern.permute.xlu0 2
    %102 = vperm.xlu0 %101, %v35
    %v103 = vpop.permute.xlu0 %102
    %105 = vset.pattern.permute.xlu0 2
    %106 = vperm.xlu0 %105, %v36
    %v107 = vpop.permute.xlu0 %106
    %109 = vset.pattern.permute.xlu0 2
    %110 = vperm.xlu0 %109, %v37
    %v111 = vpop.permute.xlu0 %110
    %v113 = vlaneseq
    %v114 = vshrl.u32 %v113, 7
    %v115 = vsub.s32 0, %v114
    %v116 = vrot.slane %v96, %v115
    %v117 = vmul.f32 %v99, %v116
    %v118 = vmul.f32 %v103, %v116
    %v119 = vmul.f32 %v107, %v116
    %v120 = vmul.f32 %v111, %v116
    %v121 = vadd.f32 %v92, %v117
    %v122 = vadd.f32 %v93, %v118
    %v123 = vadd.f32 %v94, %v119
    %v124 = vadd.f32 %v95, %v120
    %v125 = vld [vmem:[%s2] sm:$0x1]
    %v127 = vlaneseq
    %v128 = vshrl.u32 %v127, 7
    %v129 = vsub.s32 0, %v128
    %v130 = vrot.slane %v125, %v129
    %v132 = vadd.f32 %v121, %v130
    %v133 = vadd.f32 %v122, %v130
    %v134 = vadd.f32 %v123, %v130
    %v135 = vadd.f32 %v124, %v130
    %v136 = vmax.f32 %v132, 0.0
    %v137 = vmax.f32 %v133, 0.0
    %v138 = vmax.f32 %v134, 0.0
    %v139 = vmax.f32 %v135, 0.0
    %vm140 = vcmask 261120
    %v141 = vsel %vm140, %v136, -inf
    %v142 = vsel %vm140, %v137, -inf
    %v143 = vmax.f32 %v141, %v142
    %v144 = vrot.slane %v143, 4
    %v145 = vmax.f32 %v143, %v144
    %v146 = vrot.slane %v145, 2
    %v147 = vmax.f32 %v145, %v146
    %v148 = vrot.slane %v147, 1
    %v149 = vmax.f32 %v147, %v148
    %v150 = vsel %vm140, %v138, -inf
    %v151 = vsel %vm140, %v139, -inf
    %v152 = vmax.f32 %v150, %v151
    %v153 = vrot.slane %v152, 4
    %v154 = vmax.f32 %v152, %v153
    %v155 = vrot.slane %v154, 2
    %v156 = vmax.f32 %v154, %v155
    %v157 = vrot.slane %v156, 1
    %v158 = vmax.f32 %v156, %v157
    %v159 = vld [vmem:[%s3] sm:$0xff]
    %v160 = vld [vmem:[%s3 + $0x8] sm:$0xff]
    %v161 = vld [vmem:[%s3 + $0x10] sm:$0xff]
    %v162 = vld [vmem:[%s3 + $0x18] sm:$0xff]
    %vm165 = vcmask 1041409
    %v166 = vsel %vm165, %v158, %v149
    %v167 = vsel %vm140, %v166, 0
    %169 = vmatprep.subr.mxu0 0.0
    %170 = vmatpush1.msra.mxu0 0.0
    %171 = vmatprep.subr.mxu0 0.0
    %172 = vmatpush1.msra.mxu0 0.0
    %173 = vmatprep.subr.mxu0 0.0
    %174 = vmatpush1.msra.mxu0 0.0
    %175 = vmatprep.subr.mxu0 0.0
    %176 = vmatpush1.msra.mxu0 0.0
    %177 = vmatprep.subr.mxu0 0.0
    %178 = vmatpush1.msra.mxu0 0.0
    %179 = vmatprep.subr.mxu0 0.0
    %180 = vmatpush1.msra.mxu0 0.0
    %181 = vmatprep.subr.mxu0 0.0
    %182 = vmatpush1.msra.mxu0 0.0
    %183 = vmatprep.subr.mxu0 0.0
    %184 = vmatpush1.msra.mxu0 0.0
    %185 = vmatprep.subr.mxu0 0.0
    %186 = vmatpush1.msra.mxu0 0.0
    %187 = vmatprep.subr.mxu0 0.0
    %188 = vmatpush1.msra.mxu0 0.0
    %189 = vmatprep.subr.mxu0 0.0
    %190 = vmatpush1.msra.mxu0 0.0
    %191 = vmatprep.subr.mxu0 0.0
    %192 = vmatpush1.msra.mxu0 0.0
    %193 = vmatprep.subr.mxu0 0.0
    %194 = vmatpush1.msra.mxu0 %v162
    %195 = vmatprep.subr.mxu0 0.0
    %196 = vmatpush1.msra.mxu0 %v161
    %197 = vmatprep.subr.mxu0 0.0
    %198 = vmatpush1.msra.mxu0 %v160
    %199 = vmatprep.subr.mxu0 0.0
    %200 = vmatpush1.msra.mxu0 %v159
    %201 = vmatprep.subr.mxu0 0.0
    %202 = vmatpush2.msra.mxu0 0.0
    %203 = vmatprep.subr.mxu0 0.0
    %204 = vmatpush2.msra.mxu0 0.0
    %205 = vmatprep.subr.mxu0 0.0
    %206 = vmatpush2.msra.mxu0 0.0
    %207 = vmatprep.subr.mxu0 0.0
    %208 = vmatpush2.msra.mxu0 0.0
    %209 = vmatprep.subr.mxu0 0.0
    %210 = vmatpush2.msra.mxu0 0.0
    %211 = vmatprep.subr.mxu0 0.0
    %212 = vmatpush2.msra.mxu0 0.0
    %213 = vmatprep.subr.mxu0 0.0
    %214 = vmatpush2.msra.mxu0 0.0
    %215 = vmatprep.subr.mxu0 0.0
    %216 = vmatpush2.msra.mxu0 0.0
    %217 = vmatprep.subr.mxu0 0.0
    %218 = vmatpush2.msra.mxu0 0.0
    %219 = vmatprep.subr.mxu0 0.0
    %220 = vmatpush2.msra.mxu0 0.0
    %221 = vmatprep.subr.mxu0 0.0
    %222 = vmatpush2.msra.mxu0 0.0
    %223 = vmatprep.subr.mxu0 0.0
    %224 = vmatpush2.msra.mxu0 0.0
    %225 = vmatprep.subr.mxu0 0.0
    %226 = vmatpush2.msra.mxu0 0.0
    %227 = vmatprep.subr.mxu0 0.0
    %228 = vmatpush2.msra.mxu0 0.0
    %229 = vmatprep.subr.mxu0 0.0
    %230 = vmatpush2.msra.mxu0 0.0
    %231 = vmatprep.subr.mxu0 0.0
    %232 = vmatpush2.msra.mxu0 0.0
    %233 = vmatprep.mubr.f32.mxu0 0.0
    %234 = vmatmul.mubr.f32.gmra.mxu0 %v167
    %v235 = vpop.f32.mrf.mxu0
    %v236 = vadd.f32 0.0, %v235
    %v237 = vpop.f32.mrf.mxu0
    %238 = vdwg.mxu0
    %v239 = vlaneseq
    %v240 = vand.u32 %v239, 127
    %vm241 = vcmp.lt.s32.totalorder %v240, 6
    %v242 = vsel %vm241, %v236, -1e+30
    %vm243 = vcmask 1041408
    %v244 = vsel %vm243, %v242, -inf
    %245 = vmax.xlane.f32.xlu0 %v244
    %v246 = vpop.xlane.xlu0 %245
    %v247 = vsub.f32 %v242, %v246
    %v248 = vmul.f32 %v247, 1.442695
    %v249 = vpow.pop %v248
    %v250 = vsel %vm243, %v249, 0.0
    %251 = vadd.xlane.f32.xlu0 %v250
    %v252 = vpop.xlane.xlu0 %251
    %v253 = vrcp.pop %v252
    %v254 = vmul.f32 %v249, %v253
    %v255 = vadd.f32 %v254, 1e-07
    %v256 = vlog2.pop %v255
    %v257 = vmul.f32 %v256, 0.6931472
    %v258 = vmul.f32 %v254, %v257
    %v259 = vsel %vm243, %v258, 0.0
    %260 = vadd.xlane.f32.xlu0 %v259
    %v261 = vpop.xlane.xlu0 %260
    %v262 = vrot.slane %v261, 4
    %v263 = vadd.f32 %v261, %v262
    %v264 = vrot.slane %v263, 2
    %v265 = vadd.f32 %v263, %v264
    %v266 = vrot.slane %v265, 1
    %v267 = vadd.f32 %v265, %v266
    %s268 = vtos %v267
    %s269 = ssub.f32 0.0, %s268
    %v270 = vrcp.pop 2.0
    %s271 = vtos %v270
    %s272 = smul.f32 %s269, %s271
    %v273 = vsel %vm243, %v254, 0.0
    %v274 = vrot.slane %v273, 4
    %v275 = vadd.f32 %v273, %v274
    %v276 = vrot.slane %v275, 2
    %v277 = vadd.f32 %v275, %v276
    %v278 = vrot.slane %v277, 1
    %v279 = vadd.f32 %v277, %v278
    %v280 = vrcp.pop 2.0
    %v281 = vmul.f32 %v279, %v280
    %v282 = vadd.f32 %v281, 1e-07
    %v283 = vlog2.pop %v282
    %v284 = vmul.f32 %v283, 0.6931472
    %v285 = vmul.f32 %v281, %v284
    %vm286 = vcmask 1040384
    %v287 = vsel %vm286, %v285, 0.0
    %288 = vadd.xlane.f32.xlu0 %v287
    %v289 = vpop.xlane.xlu0 %288
    %v290 = vrot.slane %v289, 4
    %v291 = vadd.f32 %v289, %v290
    %v292 = vrot.slane %v291, 2
    %v293 = vadd.f32 %v291, %v292
    %v294 = vrot.slane %v293, 1
    %v295 = vadd.f32 %v293, %v294
    %s296 = vtos %v295
    %s297 = sadd.f32 %s296, 1.7917589
    %s298 = sadd.f32 %s272, %s297
    %vm299 = vcmp.eq.s32.totalorder %v240, 127
    %v300 = vstv %s298
    %v301 = vsel %vm299, %v300, %v254
    %302 = vst [vmem:[%s8] sm:$0x3] %v301
    %v303 = vsel %vm243, %v254, -inf
    %304 = vmax.xlane.f32.xlu0 %v303
    %v305 = vpop.xlane.xlu0 %304
    %vm306 = vcmp.ge.f32.partialorder %v254, %v305
    %v307 = vsel %vm306, %v240, 128
    %v308 = vsel %vm243, %v307, 2147483647
    %v309 = vand.u32 %v308, 65535
    %v310 = vshra.s32 %v308, 16
    %v311 = vcvt.s32.f32 %v309
    %v312 = vcvt.s32.f32 %v310
    %313 = vmin.xlane.f32.xlu0 %v312
    %v314 = vpop.xlane.xlu0 %313
    %vm315 = vcmp.eq.f32.partialorder %v312, %v314
    %v316 = vsel %vm315, %v311, inf
    %317 = vmin.xlane.f32.xlu0 %v316
    %v318 = vpop.xlane.xlu0 %317
    %v319 = vcvt.f32.s32 %v318
    %v320 = vcvt.f32.s32 %v314
    %v321 = vshll.u32 %v320, 16
    %v322 = vadd.s32 %v321, %v319
    %vm323 = vcmp.eq.s32.totalorder %v322, 0
    %v324 = vsel %vm323, 1, 0
    %v325 = vlaneseq
    %v326 = vshrl.u32 %v325, 7
    %v327 = vsub.s32 0, %v326
    %v328 = vrot.slane %v324, %v327
    %v329 = vlaneseq
    %v330 = vshrl.u32 %v329, 7
    %v331 = vsub.s32 1, %v330
    %v332 = vrot.slane %v324, %v331
    %vm333 = vcmp.ne.s32.totalorder %v328, 0
    %vm334 = vcmp.ne.s32.totalorder %v332, 0
    %v335 = vld [vmem:[%s4] sm:$0xff]
    %v336 = vld [vmem:[%s4 + $0x8] sm:$0xff]
    %v337 = vld [vmem:[%s4 + $0x10] sm:$0xff]
    %v338 = vld [vmem:[%s4 + $0x18] sm:$0xff]
    %v339 = vld [vmem:[%s4 + $0x20] sm:$0xff]
    %v340 = vld [vmem:[%s4 + $0x28] sm:$0xff]
    %v341 = vld [vmem:[%s4 + $0x30] sm:$0xff]
    %v342 = vld [vmem:[%s4 + $0x38] sm:$0xff]
    %v343 = vld [vmem:[%s4 + $0x40] sm:$0xff]
    %v344 = vld [vmem:[%s4 + $0x48] sm:$0xff]
    %v345 = vld [vmem:[%s4 + $0x50] sm:$0xff]
    %v346 = vld [vmem:[%s4 + $0x58] sm:$0xff]
    %v347 = vld [vmem:[%s4 + $0x60] sm:$0xff]
    %v348 = vld [vmem:[%s4 + $0x68] sm:$0xff]
    %v349 = vld [vmem:[%s4 + $0x70] sm:$0xff]
    %v350 = vld [vmem:[%s4 + $0x78] sm:$0xff]
    %v351 = vsel %vm333, 1, 0
    %v352 = vsel %vm334, 1, 0
    %vm353 = vcmp.eq.s32.totalorder %v351, 1
    %vm354 = vcmp.eq.s32.totalorder %v352, 1
    %v355 = vsel %vm353, %v335, 0.0
    %v356 = vsel %vm353, %v336, 0.0
    %v357 = vsel %vm353, %v337, 0.0
    %v358 = vsel %vm353, %v338, 0.0
    %v359 = vsel %vm353, %v339, 0.0
    %v360 = vsel %vm353, %v340, 0.0
    %v361 = vsel %vm353, %v341, 0.0
    %v362 = vsel %vm353, %v342, 0.0
    %v363 = vsel %vm353, %v343, 0.0
    %v364 = vsel %vm353, %v344, 0.0
    %v365 = vsel %vm353, %v345, 0.0
    %v366 = vsel %vm353, %v346, 0.0
    %v367 = vsel %vm353, %v347, 0.0
    %v368 = vsel %vm353, %v348, 0.0
    %v369 = vsel %vm353, %v349, 0.0
    %v370 = vsel %vm353, %v350, 0.0
    %v371 = vsel %vm354, %v335, 0.0
    %v372 = vsel %vm354, %v336, 0.0
    %v373 = vsel %vm354, %v337, 0.0
    %v374 = vsel %vm354, %v338, 0.0
    %v375 = vsel %vm354, %v339, 0.0
    %v376 = vsel %vm354, %v340, 0.0
    %v377 = vsel %vm354, %v341, 0.0
    %v378 = vsel %vm354, %v342, 0.0
    %v379 = vsel %vm354, %v343, 0.0
    %v380 = vsel %vm354, %v344, 0.0
    %v381 = vsel %vm354, %v345, 0.0
    %v382 = vsel %vm354, %v346, 0.0
    %v383 = vsel %vm354, %v347, 0.0
    %v384 = vsel %vm354, %v348, 0.0
    %v385 = vsel %vm354, %v349, 0.0
    %v386 = vsel %vm354, %v350, 0.0
    %vm387 = vcmp.eq.s32.totalorder %v322, 1
    %v388 = vsel %vm387, 1, 0
    %v389 = vlaneseq
    %v390 = vshrl.u32 %v389, 7
    %v391 = vsub.s32 0, %v390
    %v392 = vrot.slane %v388, %v391
    %v393 = vlaneseq
    %v394 = vshrl.u32 %v393, 7
    %v395 = vsub.s32 1, %v394
    %v396 = vrot.slane %v388, %v395
    %vm397 = vcmp.ne.s32.totalorder %v392, 0
    %vm398 = vcmp.ne.s32.totalorder %v396, 0
    %s399 = scalar_lea.vmem %s4, 128
    %v400 = vld [vmem:[%s399] sm:$0xff]
    %v401 = vld [vmem:[%s399 + $0x8] sm:$0xff]
    %v402 = vld [vmem:[%s399 + $0x10] sm:$0xff]
    %v403 = vld [vmem:[%s399 + $0x18] sm:$0xff]
    %v404 = vld [vmem:[%s399 + $0x20] sm:$0xff]
    %v405 = vld [vmem:[%s399 + $0x28] sm:$0xff]
    %v406 = vld [vmem:[%s399 + $0x30] sm:$0xff]
    %v407 = vld [vmem:[%s399 + $0x38] sm:$0xff]
    %v408 = vld [vmem:[%s399 + $0x40] sm:$0xff]
    %v409 = vld [vmem:[%s399 + $0x48] sm:$0xff]
    %v410 = vld [vmem:[%s399 + $0x50] sm:$0xff]
    %v411 = vld [vmem:[%s399 + $0x58] sm:$0xff]
    %v412 = vld [vmem:[%s399 + $0x60] sm:$0xff]
    %v413 = vld [vmem:[%s399 + $0x68] sm:$0xff]
    %v414 = vld [vmem:[%s399 + $0x70] sm:$0xff]
    %v415 = vld [vmem:[%s399 + $0x78] sm:$0xff]
    %v416 = vsel %vm397, 1, 0
    %v417 = vsel %vm398, 1, 0
    %vm418 = vcmp.eq.s32.totalorder %v416, 1
    %vm419 = vcmp.eq.s32.totalorder %v417, 1
    %v420 = vsel %vm418, %v400, %v355
    %v421 = vsel %vm418, %v401, %v356
    %v422 = vsel %vm418, %v402, %v357
    %v423 = vsel %vm418, %v403, %v358
    %v424 = vsel %vm418, %v404, %v359
    %v425 = vsel %vm418, %v405, %v360
    %v426 = vsel %vm418, %v406, %v361
    %v427 = vsel %vm418, %v407, %v362
    %v428 = vsel %vm418, %v408, %v363
    %v429 = vsel %vm418, %v409, %v364
    %v430 = vsel %vm418, %v410, %v365
    %v431 = vsel %vm418, %v411, %v366
    %v432 = vsel %vm418, %v412, %v367
    %v433 = vsel %vm418, %v413, %v368
    %v434 = vsel %vm418, %v414, %v369
    %v435 = vsel %vm418, %v415, %v370
    %v436 = vsel %vm419, %v400, %v371
    %v437 = vsel %vm419, %v401, %v372
    %v438 = vsel %vm419, %v402, %v373
    %v439 = vsel %vm419, %v403, %v374
    %v440 = vsel %vm419, %v404, %v375
    %v441 = vsel %vm419, %v405, %v376
    %v442 = vsel %vm419, %v406, %v377
    %v443 = vsel %vm419, %v407, %v378
    %v444 = vsel %vm419, %v408, %v379
    %v445 = vsel %vm419, %v409, %v380
    %v446 = vsel %vm419, %v410, %v381
    %v447 = vsel %vm419, %v411, %v382
    %v448 = vsel %vm419, %v412, %v383
    %v449 = vsel %vm419, %v413, %v384
    %v450 = vsel %vm419, %v414, %v385
    %v451 = vsel %vm419, %v415, %v386
    %vm452 = vcmp.eq.s32.totalorder %v322, 2
    %v453 = vsel %vm452, 1, 0
    %v454 = vlaneseq
    %v455 = vshrl.u32 %v454, 7
    %v456 = vsub.s32 0, %v455
    %v457 = vrot.slane %v453, %v456
    %v458 = vlaneseq
    %v459 = vshrl.u32 %v458, 7
    %v460 = vsub.s32 1, %v459
    %v461 = vrot.slane %v453, %v460
    %vm462 = vcmp.ne.s32.totalorder %v457, 0
    %vm463 = vcmp.ne.s32.totalorder %v461, 0
    %s464 = scalar_lea.vmem %s4, 256
    %v465 = vld [vmem:[%s464] sm:$0xff]
    %v466 = vld [vmem:[%s464 + $0x8] sm:$0xff]
    %v467 = vld [vmem:[%s464 + $0x10] sm:$0xff]
    %v468 = vld [vmem:[%s464 + $0x18] sm:$0xff]
    %v469 = vld [vmem:[%s464 + $0x20] sm:$0xff]
    %v470 = vld [vmem:[%s464 + $0x28] sm:$0xff]
    %v471 = vld [vmem:[%s464 + $0x30] sm:$0xff]
    %v472 = vld [vmem:[%s464 + $0x38] sm:$0xff]
    %v473 = vld [vmem:[%s464 + $0x40] sm:$0xff]
    %v474 = vld [vmem:[%s464 + $0x48] sm:$0xff]
    %v475 = vld [vmem:[%s464 + $0x50] sm:$0xff]
    %v476 = vld [vmem:[%s464 + $0x58] sm:$0xff]
    %v477 = vld [vmem:[%s464 + $0x60] sm:$0xff]
    %v478 = vld [vmem:[%s464 + $0x68] sm:$0xff]
    %v479 = vld [vmem:[%s464 + $0x70] sm:$0xff]
    %v480 = vld [vmem:[%s464 + $0x78] sm:$0xff]
    %v481 = vsel %vm462, 1, 0
    %v482 = vsel %vm463, 1, 0
    %vm483 = vcmp.eq.s32.totalorder %v481, 1
    %vm484 = vcmp.eq.s32.totalorder %v482, 1
    %v485 = vsel %vm483, %v465, %v420
    %v486 = vsel %vm483, %v466, %v421
    %v487 = vsel %vm483, %v467, %v422
    %v488 = vsel %vm483, %v468, %v423
    %v489 = vsel %vm483, %v469, %v424
    %v490 = vsel %vm483, %v470, %v425
    %v491 = vsel %vm483, %v471, %v426
    %v492 = vsel %vm483, %v472, %v427
    %v493 = vsel %vm483, %v473, %v428
    %v494 = vsel %vm483, %v474, %v429
    %v495 = vsel %vm483, %v475, %v430
    %v496 = vsel %vm483, %v476, %v431
    %v497 = vsel %vm483, %v477, %v432
    %v498 = vsel %vm483, %v478, %v433
    %v499 = vsel %vm483, %v479, %v434
    %v500 = vsel %vm483, %v480, %v435
    %v501 = vsel %vm484, %v465, %v436
    %v502 = vsel %vm484, %v466, %v437
    %v503 = vsel %vm484, %v467, %v438
    %v504 = vsel %vm484, %v468, %v439
    %v505 = vsel %vm484, %v469, %v440
    %v506 = vsel %vm484, %v470, %v441
    %v507 = vsel %vm484, %v471, %v442
    %v508 = vsel %vm484, %v472, %v443
    %v509 = vsel %vm484, %v473, %v444
    %v510 = vsel %vm484, %v474, %v445
    %v511 = vsel %vm484, %v475, %v446
    %v512 = vsel %vm484, %v476, %v447
    %v513 = vsel %vm484, %v477, %v448
    %v514 = vsel %vm484, %v478, %v449
    %v515 = vsel %vm484, %v479, %v450
    %v516 = vsel %vm484, %v480, %v451
    %vm517 = vcmp.eq.s32.totalorder %v322, 3
    %v518 = vsel %vm517, 1, 0
    %v519 = vlaneseq
    %v520 = vshrl.u32 %v519, 7
    %v521 = vsub.s32 0, %v520
    %v522 = vrot.slane %v518, %v521
    %v523 = vlaneseq
    %v524 = vshrl.u32 %v523, 7
    %v525 = vsub.s32 1, %v524
    %v526 = vrot.slane %v518, %v525
    %vm527 = vcmp.ne.s32.totalorder %v522, 0
    %vm528 = vcmp.ne.s32.totalorder %v526, 0
    %s529 = scalar_lea.vmem %s4, 384
    %v530 = vld [vmem:[%s529] sm:$0xff]
    %v531 = vld [vmem:[%s529 + $0x8] sm:$0xff]
    %v532 = vld [vmem:[%s529 + $0x10] sm:$0xff]
    %v533 = vld [vmem:[%s529 + $0x18] sm:$0xff]
    %v534 = vld [vmem:[%s529 + $0x20] sm:$0xff]
    %v535 = vld [vmem:[%s529 + $0x28] sm:$0xff]
    %v536 = vld [vmem:[%s529 + $0x30] sm:$0xff]
    %v537 = vld [vmem:[%s529 + $0x38] sm:$0xff]
    %v538 = vld [vmem:[%s529 + $0x40] sm:$0xff]
    %v539 = vld [vmem:[%s529 + $0x48] sm:$0xff]
    %v540 = vld [vmem:[%s529 + $0x50] sm:$0xff]
    %v541 = vld [vmem:[%s529 + $0x58] sm:$0xff]
    %v542 = vld [vmem:[%s529 + $0x60] sm:$0xff]
    %v543 = vld [vmem:[%s529 + $0x68] sm:$0xff]
    %v544 = vld [vmem:[%s529 + $0x70] sm:$0xff]
    %v545 = vld [vmem:[%s529 + $0x78] sm:$0xff]
    %v546 = vsel %vm527, 1, 0
    %v547 = vsel %vm528, 1, 0
    %vm548 = vcmp.eq.s32.totalorder %v546, 1
    %vm549 = vcmp.eq.s32.totalorder %v547, 1
    %v550 = vsel %vm548, %v530, %v485
    %v551 = vsel %vm548, %v531, %v486
    %v552 = vsel %vm548, %v532, %v487
    %v553 = vsel %vm548, %v533, %v488
    %v554 = vsel %vm548, %v534, %v489
    %v555 = vsel %vm548, %v535, %v490
    %v556 = vsel %vm548, %v536, %v491
    %v557 = vsel %vm548, %v537, %v492
    %v558 = vsel %vm548, %v538, %v493
    %v559 = vsel %vm548, %v539, %v494
    %v560 = vsel %vm548, %v540, %v495
    %v561 = vsel %vm548, %v541, %v496
    %v562 = vsel %vm548, %v542, %v497
    %v563 = vsel %vm548, %v543, %v498
    %v564 = vsel %vm548, %v544, %v499
    %v565 = vsel %vm548, %v545, %v500
    %v566 = vsel %vm549, %v530, %v501
    %v567 = vsel %vm549, %v531, %v502
    %v568 = vsel %vm549, %v532, %v503
    %v569 = vsel %vm549, %v533, %v504
    %v570 = vsel %vm549, %v534, %v505
    %v571 = vsel %vm549, %v535, %v506
    %v572 = vsel %vm549, %v536, %v507
    %v573 = vsel %vm549, %v537, %v508
    %v574 = vsel %vm549, %v538, %v509
    %v575 = vsel %vm549, %v539, %v510
    %v576 = vsel %vm549, %v540, %v511
    %v577 = vsel %vm549, %v541, %v512
    %v578 = vsel %vm549, %v542, %v513
    %v579 = vsel %vm549, %v543, %v514
    %v580 = vsel %vm549, %v544, %v515
    %v581 = vsel %vm549, %v545, %v516
    %vm582 = vcmp.eq.s32.totalorder %v322, 4
    %v583 = vsel %vm582, 1, 0
    %v584 = vlaneseq
    %v585 = vshrl.u32 %v584, 7
    %v586 = vsub.s32 0, %v585
    %v587 = vrot.slane %v583, %v586
    %v588 = vlaneseq
    %v589 = vshrl.u32 %v588, 7
    %v590 = vsub.s32 1, %v589
    %v591 = vrot.slane %v583, %v590
    %vm592 = vcmp.ne.s32.totalorder %v587, 0
    %vm593 = vcmp.ne.s32.totalorder %v591, 0
    %s594 = scalar_lea.vmem %s4, 512
    %v595 = vld [vmem:[%s594] sm:$0xff]
    %v596 = vld [vmem:[%s594 + $0x8] sm:$0xff]
    %v597 = vld [vmem:[%s594 + $0x10] sm:$0xff]
    %v598 = vld [vmem:[%s594 + $0x18] sm:$0xff]
    %v599 = vld [vmem:[%s594 + $0x20] sm:$0xff]
    %v600 = vld [vmem:[%s594 + $0x28] sm:$0xff]
    %v601 = vld [vmem:[%s594 + $0x30] sm:$0xff]
    %v602 = vld [vmem:[%s594 + $0x38] sm:$0xff]
    %v603 = vld [vmem:[%s594 + $0x40] sm:$0xff]
    %v604 = vld [vmem:[%s594 + $0x48] sm:$0xff]
    %v605 = vld [vmem:[%s594 + $0x50] sm:$0xff]
    %v606 = vld [vmem:[%s594 + $0x58] sm:$0xff]
    %v607 = vld [vmem:[%s594 + $0x60] sm:$0xff]
    %v608 = vld [vmem:[%s594 + $0x68] sm:$0xff]
    %v609 = vld [vmem:[%s594 + $0x70] sm:$0xff]
    %v610 = vld [vmem:[%s594 + $0x78] sm:$0xff]
    %v611 = vsel %vm592, 1, 0
    %v612 = vsel %vm593, 1, 0
    %vm613 = vcmp.eq.s32.totalorder %v611, 1
    %vm614 = vcmp.eq.s32.totalorder %v612, 1
    %v615 = vsel %vm613, %v595, %v550
    %v616 = vsel %vm613, %v596, %v551
    %v617 = vsel %vm613, %v597, %v552
    %v618 = vsel %vm613, %v598, %v553
    %v619 = vsel %vm613, %v599, %v554
    %v620 = vsel %vm613, %v600, %v555
    %v621 = vsel %vm613, %v601, %v556
    %v622 = vsel %vm613, %v602, %v557
    %v623 = vsel %vm613, %v603, %v558
    %v624 = vsel %vm613, %v604, %v559
    %v625 = vsel %vm613, %v605, %v560
    %v626 = vsel %vm613, %v606, %v561
    %v627 = vsel %vm613, %v607, %v562
    %v628 = vsel %vm613, %v608, %v563
    %v629 = vsel %vm613, %v609, %v564
    %v630 = vsel %vm613, %v610, %v565
    %v631 = vsel %vm614, %v595, %v566
    %v632 = vsel %vm614, %v596, %v567
    %v633 = vsel %vm614, %v597, %v568
    %v634 = vsel %vm614, %v598, %v569
    %v635 = vsel %vm614, %v599, %v570
    %v636 = vsel %vm614, %v600, %v571
    %v637 = vsel %vm614, %v601, %v572
    %v638 = vsel %vm614, %v602, %v573
    %v639 = vsel %vm614, %v603, %v574
    %v640 = vsel %vm614, %v604, %v575
    %v641 = vsel %vm614, %v605, %v576
    %v642 = vsel %vm614, %v606, %v577
    %v643 = vsel %vm614, %v607, %v578
    %v644 = vsel %vm614, %v608, %v579
    %v645 = vsel %vm614, %v609, %v580
    %v646 = vsel %vm614, %v610, %v581
    %vm647 = vcmp.eq.s32.totalorder %v322, 5
    %v648 = vsel %vm647, 1, 0
    %v649 = vlaneseq
    %v650 = vshrl.u32 %v649, 7
    %v651 = vsub.s32 0, %v650
    %v652 = vrot.slane %v648, %v651
    %v653 = vlaneseq
    %v654 = vshrl.u32 %v653, 7
    %v655 = vsub.s32 1, %v654
    %v656 = vrot.slane %v648, %v655
    %vm657 = vcmp.ne.s32.totalorder %v652, 0
    %vm658 = vcmp.ne.s32.totalorder %v656, 0
    %s659 = scalar_lea.vmem %s4, 640
    %v660 = vld [vmem:[%s659] sm:$0xff]
    %v661 = vld [vmem:[%s659 + $0x8] sm:$0xff]
    %v662 = vld [vmem:[%s659 + $0x10] sm:$0xff]
    %v663 = vld [vmem:[%s659 + $0x18] sm:$0xff]
    %v664 = vld [vmem:[%s659 + $0x20] sm:$0xff]
    %v665 = vld [vmem:[%s659 + $0x28] sm:$0xff]
    %v666 = vld [vmem:[%s659 + $0x30] sm:$0xff]
    %v667 = vld [vmem:[%s659 + $0x38] sm:$0xff]
    %v668 = vld [vmem:[%s659 + $0x40] sm:$0xff]
    %v669 = vld [vmem:[%s659 + $0x48] sm:$0xff]
    %v670 = vld [vmem:[%s659 + $0x50] sm:$0xff]
    %v671 = vld [vmem:[%s659 + $0x58] sm:$0xff]
    %v672 = vld [vmem:[%s659 + $0x60] sm:$0xff]
    %v673 = vld [vmem:[%s659 + $0x68] sm:$0xff]
    %v674 = vld [vmem:[%s659 + $0x70] sm:$0xff]
    %v675 = vld [vmem:[%s659 + $0x78] sm:$0xff]
    %v676 = vsel %vm657, 1, 0
    %v677 = vsel %vm658, 1, 0
    %vm678 = vcmp.eq.s32.totalorder %v676, 1
    %vm679 = vcmp.eq.s32.totalorder %v677, 1
    %v680 = vsel %vm678, %v660, %v615
    %v681 = vsel %vm678, %v661, %v616
    %v682 = vsel %vm678, %v662, %v617
    %v683 = vsel %vm678, %v663, %v618
    %v684 = vsel %vm678, %v664, %v619
    %v685 = vsel %vm678, %v665, %v620
    %v686 = vsel %vm678, %v666, %v621
    %v687 = vsel %vm678, %v667, %v622
    %v688 = vsel %vm678, %v668, %v623
    %v689 = vsel %vm678, %v669, %v624
    %v690 = vsel %vm678, %v670, %v625
    %v691 = vsel %vm678, %v671, %v626
    %v692 = vsel %vm678, %v672, %v627
    %v693 = vsel %vm678, %v673, %v628
    %v694 = vsel %vm678, %v674, %v629
    %v695 = vsel %vm678, %v675, %v630
    %v696 = vsel %vm679, %v660, %v631
    %v697 = vsel %vm679, %v661, %v632
    %v698 = vsel %vm679, %v662, %v633
    %v699 = vsel %vm679, %v663, %v634
    %v700 = vsel %vm679, %v664, %v635
    %v701 = vsel %vm679, %v665, %v636
    %v702 = vsel %vm679, %v666, %v637
    %v703 = vsel %vm679, %v667, %v638
    %v704 = vsel %vm679, %v668, %v639
    %v705 = vsel %vm679, %v669, %v640
    %v706 = vsel %vm679, %v670, %v641
    %v707 = vsel %vm679, %v671, %v642
    %v708 = vsel %vm679, %v672, %v643
    %v709 = vsel %vm679, %v673, %v644
    %v710 = vsel %vm679, %v674, %v645
    %v711 = vsel %vm679, %v675, %v646
    %v712 = vlaneseq
    %v713 = vshrl.u32 %v712, 7
    %v714 = vadd.s32 %v713, 8
    %v715 = vadd.s32 %v713, 16
    %v716 = vadd.s32 %v713, 24
    %v717 = vadd.s32 %v713, 32
    %v718 = vadd.s32 %v713, 40
    %v719 = vadd.s32 %v713, 48
    %v720 = vadd.s32 %v713, 56
    %v721 = vadd.s32 %v713, 64
    %v722 = vadd.s32 %v713, 72
    %v723 = vadd.s32 %v713, 80
    %v724 = vadd.s32 %v713, 88
    %v725 = vadd.s32 %v713, 96
    %v726 = vadd.s32 %v713, 104
    %v727 = vadd.s32 %v713, 112
    %v728 = vadd.s32 %v713, 120
    %vm729 = vcmp.eq.s32.totalorder %v713, %v240
    %vm730 = vcmp.eq.s32.totalorder %v714, %v240
    %vm731 = vcmp.eq.s32.totalorder %v715, %v240
    %vm732 = vcmp.eq.s32.totalorder %v716, %v240
    %vm733 = vcmp.eq.s32.totalorder %v717, %v240
    %vm734 = vcmp.eq.s32.totalorder %v718, %v240
    %vm735 = vcmp.eq.s32.totalorder %v719, %v240
    %vm736 = vcmp.eq.s32.totalorder %v720, %v240
    %vm737 = vcmp.eq.s32.totalorder %v721, %v240
    %vm738 = vcmp.eq.s32.totalorder %v722, %v240
    %vm739 = vcmp.eq.s32.totalorder %v723, %v240
    %vm740 = vcmp.eq.s32.totalorder %v724, %v240
    %vm741 = vcmp.eq.s32.totalorder %v725, %v240
    %vm742 = vcmp.eq.s32.totalorder %v726, %v240
    %vm743 = vcmp.eq.s32.totalorder %v727, %v240
    %vm744 = vcmp.eq.s32.totalorder %v728, %v240
    %v745 = vsel %vm729, 1, 0
    %v746 = vsel %vm730, 1, 0
    %v747 = vsel %vm731, 1, 0
    %v748 = vsel %vm732, 1, 0
    %v749 = vsel %vm733, 1, 0
    %v750 = vsel %vm734, 1, 0
    %v751 = vsel %vm735, 1, 0
    %v752 = vsel %vm736, 1, 0
    %v753 = vsel %vm737, 1, 0
    %v754 = vsel %vm738, 1, 0
    %v755 = vsel %vm739, 1, 0
    %v756 = vsel %vm740, 1, 0
    %v757 = vsel %vm741, 1, 0
    %v758 = vsel %vm742, 1, 0
    %v759 = vsel %vm743, 1, 0
    %v760 = vsel %vm744, 1, 0
    %vm761 = vcmp.eq.s32.totalorder %v745, 1
    %vm762 = vcmp.eq.s32.totalorder %v746, 1
    %vm763 = vcmp.eq.s32.totalorder %v747, 1
    %vm764 = vcmp.eq.s32.totalorder %v748, 1
    %vm765 = vcmp.eq.s32.totalorder %v749, 1
    %vm766 = vcmp.eq.s32.totalorder %v750, 1
    %vm767 = vcmp.eq.s32.totalorder %v751, 1
    %vm768 = vcmp.eq.s32.totalorder %v752, 1
    %vm769 = vcmp.eq.s32.totalorder %v753, 1
    %vm770 = vcmp.eq.s32.totalorder %v754, 1
    %vm771 = vcmp.eq.s32.totalorder %v755, 1
    %vm772 = vcmp.eq.s32.totalorder %v756, 1
    %vm773 = vcmp.eq.s32.totalorder %v757, 1
    %vm774 = vcmp.eq.s32.totalorder %v758, 1
    %vm775 = vcmp.eq.s32.totalorder %v759, 1
    %vm776 = vcmp.eq.s32.totalorder %v760, 1
    %v777 = vsel %vm761, %v680, 0.0
    %v778 = vsel %vm762, %v681, 0.0
    %v779 = vsel %vm763, %v682, 0.0
    %v780 = vsel %vm764, %v683, 0.0
    %v781 = vsel %vm765, %v684, 0.0
    %v782 = vsel %vm766, %v685, 0.0
    %v783 = vsel %vm767, %v686, 0.0
    %v784 = vsel %vm768, %v687, 0.0
    %v785 = vsel %vm769, %v688, 0.0
    %v786 = vsel %vm770, %v689, 0.0
    %v787 = vsel %vm771, %v690, 0.0
    %v788 = vsel %vm772, %v691, 0.0
    %v789 = vsel %vm773, %v692, 0.0
    %v790 = vsel %vm774, %v693, 0.0
    %v791 = vsel %vm775, %v694, 0.0
    %v792 = vsel %vm776, %v695, 0.0
    %v793 = vsel %vm761, %v696, 0.0
    %v794 = vsel %vm762, %v697, 0.0
    %v795 = vsel %vm763, %v698, 0.0
    %v796 = vsel %vm764, %v699, 0.0
    %v797 = vsel %vm765, %v700, 0.0
    %v798 = vsel %vm766, %v701, 0.0
    %v799 = vsel %vm767, %v702, 0.0
    %v800 = vsel %vm768, %v703, 0.0
    %v801 = vsel %vm769, %v704, 0.0
    %v802 = vsel %vm770, %v705, 0.0
    %v803 = vsel %vm771, %v706, 0.0
    %v804 = vsel %vm772, %v707, 0.0
    %v805 = vsel %vm773, %v708, 0.0
    %v806 = vsel %vm774, %v709, 0.0
    %v807 = vsel %vm775, %v710, 0.0
    %v808 = vsel %vm776, %v711, 0.0
    %v809 = vadd.f32 %v777, %v778
    %v810 = vadd.f32 %v809, %v779
    %v811 = vadd.f32 %v810, %v780
    %v812 = vadd.f32 %v811, %v781
    %v813 = vadd.f32 %v812, %v782
    %v814 = vadd.f32 %v813, %v783
    %v815 = vadd.f32 %v814, %v784
    %v816 = vadd.f32 %v815, %v785
    %v817 = vadd.f32 %v816, %v786
    %v818 = vadd.f32 %v817, %v787
    %v819 = vadd.f32 %v818, %v788
    %v820 = vadd.f32 %v819, %v789
    %v821 = vadd.f32 %v820, %v790
    %v822 = vadd.f32 %v821, %v791
    %v823 = vadd.f32 %v822, %v792
    %v824 = vrot.slane %v823, 4
    %v825 = vadd.f32 %v823, %v824
    %v826 = vrot.slane %v825, 2
    %v827 = vadd.f32 %v825, %v826
    %v828 = vrot.slane %v827, 1
    %v829 = vadd.f32 %v827, %v828
    %v830 = vadd.f32 %v793, %v794
    %v831 = vadd.f32 %v830, %v795
    %v832 = vadd.f32 %v831, %v796
    %v833 = vadd.f32 %v832, %v797
    %v834 = vadd.f32 %v833, %v798
    %v835 = vadd.f32 %v834, %v799
    %v836 = vadd.f32 %v835, %v800
    %v837 = vadd.f32 %v836, %v801
    %v838 = vadd.f32 %v837, %v802
    %v839 = vadd.f32 %v838, %v803
    %v840 = vadd.f32 %v839, %v804
    %v841 = vadd.f32 %v840, %v805
    %v842 = vadd.f32 %v841, %v806
    %v843 = vadd.f32 %v842, %v807
    %v844 = vadd.f32 %v843, %v808
    %v845 = vrot.slane %v844, 4
    %v846 = vadd.f32 %v844, %v845
    %v847 = vrot.slane %v846, 2
    %v848 = vadd.f32 %v846, %v847
    %v849 = vrot.slane %v848, 1
    %v850 = vadd.f32 %v848, %v849
    %v851 = vadd.f32 %v829, 1e-08
    %v852 = vadd.f32 %v850, 1e-08
    %v853 = vrcp.pop %v851
    %v854 = vmul.f32 %v680, %v853
    %v855 = vmul.f32 %v681, %v853
    %v856 = vmul.f32 %v682, %v853
    %v857 = vmul.f32 %v683, %v853
    %v858 = vmul.f32 %v684, %v853
    %v859 = vmul.f32 %v685, %v853
    %v860 = vmul.f32 %v686, %v853
    %v861 = vmul.f32 %v687, %v853
    %v862 = vmul.f32 %v688, %v853
    %v863 = vmul.f32 %v689, %v853
    %v864 = vmul.f32 %v690, %v853
    %v865 = vmul.f32 %v691, %v853
    %v866 = vmul.f32 %v692, %v853
    %v867 = vmul.f32 %v693, %v853
    %v868 = vmul.f32 %v694, %v853
    %v869 = vmul.f32 %v695, %v853
    %v870 = vrcp.pop %v852
    %v871 = vmul.f32 %v696, %v870
    %v872 = vmul.f32 %v697, %v870
    %v873 = vmul.f32 %v698, %v870
    %v874 = vmul.f32 %v699, %v870
    %v875 = vmul.f32 %v700, %v870
    %v876 = vmul.f32 %v701, %v870
    %v877 = vmul.f32 %v702, %v870
    %v878 = vmul.f32 %v703, %v870
    %v879 = vmul.f32 %v704, %v870
    %v880 = vmul.f32 %v705, %v870
    %v881 = vmul.f32 %v706, %v870
    %v882 = vmul.f32 %v707, %v870
    %v883 = vmul.f32 %v708, %v870
    %v884 = vmul.f32 %v709, %v870
    %v885 = vmul.f32 %v710, %v870
    %v886 = vmul.f32 %v711, %v870
    %v887 = vsel %vm761, 1.0, %v854
    %v888 = vsel %vm762, 1.0, %v855
    %v889 = vsel %vm763, 1.0, %v856
    %v890 = vsel %vm764, 1.0, %v857
    %v891 = vsel %vm765, 1.0, %v858
    %v892 = vsel %vm766, 1.0, %v859
    %v893 = vsel %vm767, 1.0, %v860
    %v894 = vsel %vm768, 1.0, %v861
    %v895 = vsel %vm769, 1.0, %v862
    %v896 = vsel %vm770, 1.0, %v863
    %v897 = vsel %vm771, 1.0, %v864
    %v898 = vsel %vm772, 1.0, %v865
    %v899 = vsel %vm773, 1.0, %v866
    %v900 = vsel %vm774, 1.0, %v867
    %v901 = vsel %vm775, 1.0, %v868
    %v902 = vsel %vm776, 1.0, %v869
    %v903 = vsel %vm761, 1.0, %v871
    %v904 = vsel %vm762, 1.0, %v872
    %v905 = vsel %vm763, 1.0, %v873
    %v906 = vsel %vm764, 1.0, %v874
    %v907 = vsel %vm765, 1.0, %v875
    %v908 = vsel %vm766, 1.0, %v876
    %v909 = vsel %vm767, 1.0, %v877
    %v910 = vsel %vm768, 1.0, %v878
    %v911 = vsel %vm769, 1.0, %v879
    %v912 = vsel %vm770, 1.0, %v880
    %v913 = vsel %vm771, 1.0, %v881
    %v914 = vsel %vm772, 1.0, %v882
    %v915 = vsel %vm773, 1.0, %v883
    %v916 = vsel %vm774, 1.0, %v884
    %v917 = vsel %vm775, 1.0, %v885
    %v918 = vsel %vm776, 1.0, %v886
    %919 = vst [vmem:[%s9] sm:$0xff] %v887
    %920 = vst [vmem:[%s9 + $0x8] sm:$0xff] %v888
    %921 = vst [vmem:[%s9 + $0x10] sm:$0xff] %v889
    %922 = vst [vmem:[%s9 + $0x18] sm:$0xff] %v890
    %923 = vst [vmem:[%s9 + $0x20] sm:$0xff] %v891
    %924 = vst [vmem:[%s9 + $0x28] sm:$0xff] %v892
    %925 = vst [vmem:[%s9 + $0x30] sm:$0xff] %v893
    %926 = vst [vmem:[%s9 + $0x38] sm:$0xff] %v894
    %927 = vst [vmem:[%s9 + $0x40] sm:$0xff] %v895
    %928 = vst [vmem:[%s9 + $0x48] sm:$0xff] %v896
    %929 = vst [vmem:[%s9 + $0x50] sm:$0xff] %v897
    %930 = vst [vmem:[%s9 + $0x58] sm:$0xff] %v898
    %931 = vst [vmem:[%s9 + $0x60] sm:$0xff] %v899
    %932 = vst [vmem:[%s9 + $0x68] sm:$0xff] %v900
    %933 = vst [vmem:[%s9 + $0x70] sm:$0xff] %v901
    %934 = vst [vmem:[%s9 + $0x78] sm:$0xff] %v902
    %935 = vst [vmem:[%s9 + $0x80] sm:$0xff] %v903
    %936 = vst [vmem:[%s9 + $0x88] sm:$0xff] %v904
    %937 = vst [vmem:[%s9 + $0x90] sm:$0xff] %v905
    %938 = vst [vmem:[%s9 + $0x98] sm:$0xff] %v906
    %939 = vst [vmem:[%s9 + $0xa0] sm:$0xff] %v907
    %940 = vst [vmem:[%s9 + $0xa8] sm:$0xff] %v908
    %941 = vst [vmem:[%s9 + $0xb0] sm:$0xff] %v909
    %942 = vst [vmem:[%s9 + $0xb8] sm:$0xff] %v910
    %943 = vst [vmem:[%s9 + $0xc0] sm:$0xff] %v911
    %944 = vst [vmem:[%s9 + $0xc8] sm:$0xff] %v912
    %945 = vst [vmem:[%s9 + $0xd0] sm:$0xff] %v913
    %946 = vst [vmem:[%s9 + $0xd8] sm:$0xff] %v914
    %947 = vst [vmem:[%s9 + $0xe0] sm:$0xff] %v915
    %948 = vst [vmem:[%s9 + $0xe8] sm:$0xff] %v916
    %949 = vst [vmem:[%s9 + $0xf0] sm:$0xff] %v917
    %950 = vst [vmem:[%s9 + $0xf8] sm:$0xff] %v918
    %v951 = vadd.f32 %v887, %v888
    %v952 = vadd.f32 %v951, %v889
    %v953 = vadd.f32 %v952, %v890
    %v954 = vadd.f32 %v953, %v891
    %v955 = vadd.f32 %v954, %v892
    %v956 = vadd.f32 %v955, %v893
    %v957 = vadd.f32 %v956, %v894
    %v958 = vadd.f32 %v957, %v895
    %v959 = vadd.f32 %v958, %v896
    %v960 = vadd.f32 %v959, %v897
    %v961 = vadd.f32 %v960, %v898
    %v962 = vadd.f32 %v961, %v899
    %v963 = vadd.f32 %v962, %v900
    %v964 = vadd.f32 %v963, %v901
    %v965 = vadd.f32 %v964, %v902
    %v966 = vrot.slane %v965, 4
    %v967 = vadd.f32 %v965, %v966
    %v968 = vrot.slane %v967, 2
    %v969 = vadd.f32 %v967, %v968
    %v970 = vrot.slane %v969, 1
    %v971 = vadd.f32 %v969, %v970
    %v972 = vadd.f32 %v903, %v904
    %v973 = vadd.f32 %v972, %v905
    %v974 = vadd.f32 %v973, %v906
    %v975 = vadd.f32 %v974, %v907
    %v976 = vadd.f32 %v975, %v908
    %v977 = vadd.f32 %v976, %v909
    %v978 = vadd.f32 %v977, %v910
    %v979 = vadd.f32 %v978, %v911
    %v980 = vadd.f32 %v979, %v912
    %v981 = vadd.f32 %v980, %v913
    %v982 = vadd.f32 %v981, %v914
    %v983 = vadd.f32 %v982, %v915
    %v984 = vadd.f32 %v983, %v916
    %v985 = vadd.f32 %v984, %v917
    %v986 = vadd.f32 %v985, %v918
    %v987 = vrot.slane %v986, 4
    %v988 = vadd.f32 %v986, %v987
    %v989 = vrot.slane %v988, 2
    %v990 = vadd.f32 %v988, %v989
    %v991 = vrot.slane %v990, 1
    %v992 = vadd.f32 %v990, %v991
    %v993 = vrsqrt.pop %v971
    %v994 = vrsqrt.pop %v992
    %v995 = vld [vmem:[%s5] sm:$0xf]
    %v996 = vld [vmem:[%s5 + $0x4] sm:$0xf]
    %v997 = vld [vmem:[%s5 + $0x8] sm:$0xf]
    %v998 = vld [vmem:[%s5 + $0xc] sm:$0xf]
    %v999 = vld [vmem:[%s5 + $0x10] sm:$0xf]
    %v1000 = vld [vmem:[%s5 + $0x14] sm:$0xf]
    %v1001 = vld [vmem:[%s5 + $0x18] sm:$0xf]
    %v1002 = vld [vmem:[%s5 + $0x1c] sm:$0xf]
    %v1003 = vld [vmem:[%s5 + $0x20] sm:$0xf]
    %v1004 = vld [vmem:[%s5 + $0x24] sm:$0xf]
    %v1005 = vld [vmem:[%s5 + $0x28] sm:$0xf]
    %v1006 = vld [vmem:[%s5 + $0x2c] sm:$0xf]
    %v1007 = vld [vmem:[%s5 + $0x30] sm:$0xf]
    %v1008 = vld [vmem:[%s5 + $0x34] sm:$0xf]
    %v1009 = vld [vmem:[%s5 + $0x38] sm:$0xf]
    %v1010 = vld [vmem:[%s5 + $0x3c] sm:$0xf]
    %v1011 = vld [vmem:[%s6] sm:$0xf]
    %v1012 = vld [vmem:[%s6 + $0x4] sm:$0xf]
    %v1029 = vunpack.c.l.b16 %v995
    %v1030 = vunpack.c.l.b16 %v996
    %v1031 = vunpack.c.l.b16 %v997
    %v1032 = vunpack.c.l.b16 %v998
    %v1033 = vunpack.c.l.b16 %v999
    %v1034 = vunpack.c.l.b16 %v1000
    %v1035 = vunpack.c.l.b16 %v1001
    %v1036 = vunpack.c.l.b16 %v1002
    %v1037 = vunpack.c.l.b16 %v1003
    %v1038 = vunpack.c.l.b16 %v1004
    %v1039 = vunpack.c.l.b16 %v1005
    %v1040 = vunpack.c.l.b16 %v1006
    %v1041 = vunpack.c.l.b16 %v1007
    %v1042 = vunpack.c.l.b16 %v1008
    %v1043 = vunpack.c.l.b16 %v1009
    %v1044 = vunpack.c.l.b16 %v1010
    %v1045 = vpack.c.b16 %v1030, %v1029
    %v1046 = vpack.c.b16 %v1032, %v1031
    %v1047 = vpack.c.b16 %v1034, %v1033
    %v1048 = vpack.c.b16 %v1036, %v1035
    %v1049 = vpack.c.b16 %v1038, %v1037
    %v1050 = vpack.c.b16 %v1040, %v1039
    %v1051 = vpack.c.b16 %v1042, %v1041
    %v1052 = vpack.c.b16 %v1044, %v1043
    %v1055 = vunpack.c.l.b16 %v1011
    %v1056 = vunpack.c.l.b16 %v1012
    %v1057 = vpack.c.b16 %v1056, %v1055
    %vm1059 = vcmask 130048
    %v1061 = vsel %vm1059, %v1045, 0
    %v1064 = vsel %vm1059, %v1046, 0
    %v1067 = vsel %vm1059, %v1047, 0
    %v1070 = vsel %vm1059, %v1048, 0
    %v1073 = vsel %vm1059, %v1049, 0
    %v1076 = vsel %vm1059, %v1050, 0
    %v1079 = vsel %vm1059, %v1051, 0
    %v1082 = vsel %vm1059, %v1052, 0
    %1084 = vmatprep.subr.bf16.mxu0 0
    %1085 = vmatpush1.bf16.msra.mxu0 0
    %1086 = vmatprep.subr.bf16.mxu0 0
    %1087 = vmatpush1.bf16.msra.mxu0 0
    %1088 = vmatprep.subr.bf16.mxu0 0
    %1089 = vmatpush1.bf16.msra.mxu0 0
    %1090 = vmatprep.subr.bf16.mxu0 0
    %1091 = vmatpush1.bf16.msra.mxu0 0
    %1092 = vmatprep.subr.bf16.mxu0 0
    %1093 = vmatpush1.bf16.msra.mxu0 0
    %1094 = vmatprep.subr.bf16.mxu0 0
    %1095 = vmatpush1.bf16.msra.mxu0 0
    %1096 = vmatprep.subr.bf16.mxu0 0
    %1097 = vmatpush1.bf16.msra.mxu0 0
    %1098 = vmatprep.subr.bf16.mxu0 0
    %1099 = vmatpush1.bf16.msra.mxu0 %v1057
    %1100 = vmatprep.subr.bf16.mxu0 0
    %1101 = vmatpush2.bf16.msra.mxu0 0
    %1102 = vmatprep.subr.bf16.mxu0 0
    %1103 = vmatpush2.bf16.msra.mxu0 0
    %1104 = vmatprep.subr.bf16.mxu0 0
    %1105 = vmatpush2.bf16.msra.mxu0 0
    %1106 = vmatprep.subr.bf16.mxu0 0
    %1107 = vmatpush2.bf16.msra.mxu0 0
    %1108 = vmatprep.subr.bf16.mxu0 0
    %1109 = vmatpush2.bf16.msra.mxu0 0
    %1110 = vmatprep.subr.bf16.mxu0 0
    %1111 = vmatpush2.bf16.msra.mxu0 0
    %1112 = vmatprep.subr.bf16.mxu0 0
    %1113 = vmatpush2.bf16.msra.mxu0 0
    %1114 = vmatprep.subr.bf16.mxu0 0
    %1115 = vmatpush2.bf16.msra.mxu0 0
    %1116 = vmatprep.mubr.bf16.mxu0 0
    %1117 = vmatmul.mubr.bf16.gmra.mxu0 %v1061
    %v1118 = vpop.f32.mrf.mxu0
    %v1119 = vadd.f32 0.0, %v1118
    %v1120 = vpop.f32.mrf.mxu0
    %v1121 = vpop.f32.mrf.mxu0
    %v1122 = vadd.f32 0.0, %v1121
    %v1123 = vpop.f32.mrf.mxu0
    %1124 = vmatprep.mubr.bf16.mxu0 0
    %1125 = vmatmul.mubr.bf16.gmra.mxu0 %v1064
    %v1126 = vpop.f32.mrf.mxu0
    %v1127 = vadd.f32 0.0, %v1126
    %v1128 = vpop.f32.mrf.mxu0
    %v1129 = vpop.f32.mrf.mxu0
    %v1130 = vadd.f32 0.0, %v1129
    %v1131 = vpop.f32.mrf.mxu0
    %1132 = vmatprep.mubr.bf16.mxu0 0
    %1133 = vmatmul.mubr.bf16.gmra.mxu0 %v1067
    %v1134 = vpop.f32.mrf.mxu0
    %v1135 = vadd.f32 0.0, %v1134
    %v1136 = vpop.f32.mrf.mxu0
    %v1137 = vpop.f32.mrf.mxu0
    %v1138 = vadd.f32 0.0, %v1137
    %v1139 = vpop.f32.mrf.mxu0
    %1140 = vmatprep.mubr.bf16.mxu0 0
    %1141 = vmatmul.mubr.bf16.gmra.mxu0 %v1070
    %v1142 = vpop.f32.mrf.mxu0
    %v1143 = vadd.f32 0.0, %v1142
    %v1144 = vpop.f32.mrf.mxu0
    %v1145 = vpop.f32.mrf.mxu0
    %v1146 = vadd.f32 0.0, %v1145
    %v1147 = vpop.f32.mrf.mxu0
    %1148 = vmatprep.mubr.bf16.mxu0 0
    %1149 = vmatmul.mubr.bf16.gmra.mxu0 %v1073
    %v1150 = vpop.f32.mrf.mxu0
    %v1151 = vadd.f32 0.0, %v1150
    %v1152 = vpop.f32.mrf.mxu0
    %v1153 = vpop.f32.mrf.mxu0
    %v1154 = vadd.f32 0.0, %v1153
    %v1155 = vpop.f32.mrf.mxu0
    %1156 = vmatprep.mubr.bf16.mxu0 0
    %1157 = vmatmul.mubr.bf16.gmra.mxu0 %v1076
    %v1158 = vpop.f32.mrf.mxu0
    %v1159 = vadd.f32 0.0, %v1158
    %v1160 = vpop.f32.mrf.mxu0
    %v1161 = vpop.f32.mrf.mxu0
    %v1162 = vadd.f32 0.0, %v1161
    %v1163 = vpop.f32.mrf.mxu0
    %1164 = vmatprep.mubr.bf16.mxu0 0
    %1165 = vmatmul.mubr.bf16.gmra.mxu0 %v1079
    %v1166 = vpop.f32.mrf.mxu0
    %v1167 = vadd.f32 0.0, %v1166
    %v1168 = vpop.f32.mrf.mxu0
    %v1169 = vpop.f32.mrf.mxu0
    %v1170 = vadd.f32 0.0, %v1169
    %v1171 = vpop.f32.mrf.mxu0
    %1172 = vmatprep.mubr.bf16.mxu0 0
    %1173 = vmatmul.mubr.bf16.gmra.mxu0 %v1082
    %v1174 = vpop.f32.mrf.mxu0
    %v1175 = vadd.f32 0.0, %v1174
    %v1176 = vpop.f32.mrf.mxu0
    %v1177 = vpop.f32.mrf.mxu0
    %v1178 = vadd.f32 0.0, %v1177
    %v1179 = vpop.f32.mrf.mxu0
    %1180 = vdwg.mxu0
    %v1181 = vpack.c.bf16 %v149, %v149
    %v1182 = vpack.c.bf16 %v158, %v158
    %v1183 = vld [vmem:[%s7] sm:$0xf]
    %v1184 = vld [vmem:[%s7 + $0x4] sm:$0xf]
    %v1185 = vld [vmem:[%s7 + $0x8] sm:$0xf]
    %v1186 = vld [vmem:[%s7 + $0xc] sm:$0xf]
    %v1189 = vunpack.c.l.b16 %v1181
    %v1190 = vunpack.c.l.b16 %v1182
    %v1191 = vsel %vm165, %v1190, %v1189
    %v1192 = vpack.c.b16 %v1191, %v1191
    %v1197 = vunpack.c.l.b16 %v1183
    %v1198 = vunpack.c.l.b16 %v1184
    %v1199 = vunpack.c.l.b16 %v1185
    %v1200 = vunpack.c.l.b16 %v1186
    %v1201 = vpack.c.b16 %v1198, %v1197
    %v1202 = vpack.c.b16 %v1200, %v1199
    %v1206 = vsel %vm140, %v1192, 0
    %1208 = vmatprep.subr.bf16.mxu0 0
    %1209 = vmatpush1.bf16.msra.mxu0 0
    %1210 = vmatprep.subr.bf16.mxu0 0
    %1211 = vmatpush1.bf16.msra.mxu0 0
    %1212 = vmatprep.subr.bf16.mxu0 0
    %1213 = vmatpush1.bf16.msra.mxu0 0
    %1214 = vmatprep.subr.bf16.mxu0 0
    %1215 = vmatpush1.bf16.msra.mxu0 0
    %1216 = vmatprep.subr.bf16.mxu0 0
    %1217 = vmatpush1.bf16.msra.mxu0 0
    %1218 = vmatprep.subr.bf16.mxu0 0
    %1219 = vmatpush1.bf16.msra.mxu0 0
    %1220 = vmatprep.subr.bf16.mxu0 0
    %1221 = vmatpush1.bf16.msra.mxu0 %v1202
    %1222 = vmatprep.subr.bf16.mxu0 0
    %1223 = vmatpush1.bf16.msra.mxu0 %v1201
    %1224 = vmatprep.subr.bf16.mxu0 0
    %1225 = vmatpush2.bf16.msra.mxu0 0
    %1226 = vmatprep.subr.bf16.mxu0 0
    %1227 = vmatpush2.bf16.msra.mxu0 0
    %1228 = vmatprep.subr.bf16.mxu0 0
    %1229 = vmatpush2.bf16.msra.mxu0 0
    %1230 = vmatprep.subr.bf16.mxu0 0
    %1231 = vmatpush2.bf16.msra.mxu0 0
    %1232 = vmatprep.subr.bf16.mxu0 0
    %1233 = vmatpush2.bf16.msra.mxu0 0
    %1234 = vmatprep.subr.bf16.mxu0 0
    %1235 = vmatpush2.bf16.msra.mxu0 0
    %1236 = vmatprep.subr.bf16.mxu0 0
    %1237 = vmatpush2.bf16.msra.mxu0 0
    %1238 = vmatprep.subr.bf16.mxu0 0
    %1239 = vmatpush2.bf16.msra.mxu0 0
    %1240 = vmatprep.mubr.bf16.mxu0 0
    %1241 = vmatmul.mubr.bf16.gmra.mxu0 %v1206
    %v1242 = vpop.f32.mrf.mxu0
    %v1243 = vadd.f32 0.0, %v1242
    %v1244 = vpop.f32.mrf.mxu0
    %v1245 = vpop.f32.mrf.mxu0
    %v1246 = vpop.f32.mrf.mxu0
    %1247 = vdwg.mxu0
    %v1248 = vmul.f32 %v887, %v993
    %v1249 = vmul.f32 %v888, %v993
    %v1250 = vmul.f32 %v889, %v993
    %v1251 = vmul.f32 %v890, %v993
    %v1252 = vmul.f32 %v891, %v993
    %v1253 = vmul.f32 %v892, %v993
    %v1254 = vmul.f32 %v893, %v993
    %v1255 = vmul.f32 %v894, %v993
    %v1256 = vmul.f32 %v895, %v993
    %v1257 = vmul.f32 %v896, %v993
    %v1258 = vmul.f32 %v897, %v993
    %v1259 = vmul.f32 %v898, %v993
    %v1260 = vmul.f32 %v899, %v993
    %v1261 = vmul.f32 %v900, %v993
    %v1262 = vmul.f32 %v901, %v993
    %v1263 = vmul.f32 %v902, %v993
    %v1264 = vmul.f32 %v903, %v994
    %v1265 = vmul.f32 %v904, %v994
    %v1266 = vmul.f32 %v905, %v994
    %v1267 = vmul.f32 %v906, %v994
    %v1268 = vmul.f32 %v907, %v994
    %v1269 = vmul.f32 %v908, %v994
    %v1270 = vmul.f32 %v909, %v994
    %v1271 = vmul.f32 %v910, %v994
    %v1272 = vmul.f32 %v911, %v994
    %v1273 = vmul.f32 %v912, %v994
    %v1274 = vmul.f32 %v913, %v994
    %v1275 = vmul.f32 %v914, %v994
    %v1276 = vmul.f32 %v915, %v994
    %v1277 = vmul.f32 %v916, %v994
    %v1278 = vmul.f32 %v917, %v994
    %v1279 = vmul.f32 %v918, %v994
    %1280 = vmatprep.subr.mxu0 0.0
    %1281 = vmatpush1.msra.mxu0 %v1178
    %1282 = vmatprep.subr.mxu0 0.0
    %1283 = vmatpush1.msra.mxu0 %v1175
    %1284 = vmatprep.subr.mxu0 0.0
    %1285 = vmatpush1.msra.mxu0 %v1170
    %1286 = vmatprep.subr.mxu0 0.0
    %1287 = vmatpush1.msra.mxu0 %v1167
    %1288 = vmatprep.subr.mxu0 0.0
    %1289 = vmatpush1.msra.mxu0 %v1162
    %1290 = vmatprep.subr.mxu0 0.0
    %1291 = vmatpush1.msra.mxu0 %v1159
    %1292 = vmatprep.subr.mxu0 0.0
    %1293 = vmatpush1.msra.mxu0 %v1154
    %1294 = vmatprep.subr.mxu0 0.0
    %1295 = vmatpush1.msra.mxu0 %v1151
    %1296 = vmatprep.subr.mxu0 0.0
    %1297 = vmatpush1.msra.mxu0 %v1146
    %1298 = vmatprep.subr.mxu0 0.0
    %1299 = vmatpush1.msra.mxu0 %v1143
    %1300 = vmatprep.subr.mxu0 0.0
    %1301 = vmatpush1.msra.mxu0 %v1138
    %1302 = vmatprep.subr.mxu0 0.0
    %1303 = vmatpush1.msra.mxu0 %v1135
    %1304 = vmatprep.subr.mxu0 0.0
    %1305 = vmatpush1.msra.mxu0 %v1130
    %1306 = vmatprep.subr.mxu0 0.0
    %1307 = vmatpush1.msra.mxu0 %v1127
    %1308 = vmatprep.subr.mxu0 0.0
    %1309 = vmatpush1.msra.mxu0 %v1122
    %1310 = vmatprep.subr.mxu0 0.0
    %1311 = vmatpush1.msra.mxu0 %v1119
    %1312 = vmatprep.subr.mxu0 0.0
    %1313 = vmatpush2.msra.mxu0 0.0
    %1314 = vmatprep.subr.mxu0 0.0
    %1315 = vmatpush2.msra.mxu0 0.0
    %1316 = vmatprep.subr.mxu0 0.0
    %1317 = vmatpush2.msra.mxu0 0.0
    %1318 = vmatprep.subr.mxu0 0.0
    %1319 = vmatpush2.msra.mxu0 0.0
    %1320 = vmatprep.subr.mxu0 0.0
    %1321 = vmatpush2.msra.mxu0 0.0
    %1322 = vmatprep.subr.mxu0 0.0
    %1323 = vmatpush2.msra.mxu0 0.0
    %1324 = vmatprep.subr.mxu0 0.0
    %1325 = vmatpush2.msra.mxu0 0.0
    %1326 = vmatprep.subr.mxu0 0.0
    %1327 = vmatpush2.msra.mxu0 0.0
    %1328 = vmatprep.subr.mxu0 0.0
    %1329 = vmatpush2.msra.mxu0 0.0
    %1330 = vmatprep.subr.mxu0 0.0
    %1331 = vmatpush2.msra.mxu0 0.0
    %1332 = vmatprep.subr.mxu0 0.0
    %1333 = vmatpush2.msra.mxu0 0.0
    %1334 = vmatprep.subr.mxu0 0.0
    %1335 = vmatpush2.msra.mxu0 0.0
    %1336 = vmatprep.subr.mxu0 0.0
    %1337 = vmatpush2.msra.mxu0 0.0
    %1338 = vmatprep.subr.mxu0 0.0
    %1339 = vmatpush2.msra.mxu0 0.0
    %1340 = vmatprep.subr.mxu0 0.0
    %1341 = vmatpush2.msra.mxu0 0.0
    %1342 = vmatprep.subr.mxu0 0.0
    %1343 = vmatpush2.msra.mxu0 0.0
    %1344 = vmatprep.mubr.f32.mxu0 0.0
    %1345 = vmatmul.mubr.f32.gmra.mxu0 %v1248
    %v1346 = vpop.f32.mrf.mxu0
    %v1347 = vadd.f32 0.0, %v1346
    %v1348 = vpop.f32.mrf.mxu0
    %1349 = vmatprep.mubr.f32.mxu0 0.0
    %1350 = vmatmul.mubr.f32.gmra.mxu0 %v1249
    %v1351 = vpop.f32.mrf.mxu0
    %v1352 = vadd.f32 0.0, %v1351
    %v1353 = vpop.f32.mrf.mxu0
    %1354 = vmatprep.mubr.f32.mxu0 0.0
    %1355 = vmatmul.mubr.f32.gmra.mxu0 %v1250
    %v1356 = vpop.f32.mrf.mxu0
    %v1357 = vadd.f32 0.0, %v1356
    %v1358 = vpop.f32.mrf.mxu0
    %1359 = vmatprep.mubr.f32.mxu0 0.0
    %1360 = vmatmul.mubr.f32.gmra.mxu0 %v1251
    %v1361 = vpop.f32.mrf.mxu0
    %v1362 = vadd.f32 0.0, %v1361
    %v1363 = vpop.f32.mrf.mxu0
    %1364 = vmatprep.mubr.f32.mxu0 0.0
    %1365 = vmatmul.mubr.f32.gmra.mxu0 %v1252
    %v1366 = vpop.f32.mrf.mxu0
    %v1367 = vadd.f32 0.0, %v1366
    %v1368 = vpop.f32.mrf.mxu0
    %1369 = vmatprep.mubr.f32.mxu0 0.0
    %1370 = vmatmul.mubr.f32.gmra.mxu0 %v1253
    %v1371 = vpop.f32.mrf.mxu0
    %v1372 = vadd.f32 0.0, %v1371
    %v1373 = vpop.f32.mrf.mxu0
    %1374 = vmatprep.mubr.f32.mxu0 0.0
    %1375 = vmatmul.mubr.f32.gmra.mxu0 %v1254
    %v1376 = vpop.f32.mrf.mxu0
    %v1377 = vadd.f32 0.0, %v1376
    %v1378 = vpop.f32.mrf.mxu0
    %1379 = vmatprep.mubr.f32.mxu0 0.0
    %1380 = vmatmul.mubr.f32.gmra.mxu0 %v1255
    %v1381 = vpop.f32.mrf.mxu0
    %v1382 = vadd.f32 0.0, %v1381
    %v1383 = vpop.f32.mrf.mxu0
    %1384 = vmatprep.mubr.f32.mxu0 0.0
    %1385 = vmatmul.mubr.f32.gmra.mxu0 %v1256
    %v1386 = vpop.f32.mrf.mxu0
    %v1387 = vadd.f32 0.0, %v1386
    %v1388 = vpop.f32.mrf.mxu0
    %1389 = vmatprep.mubr.f32.mxu0 0.0
    %1390 = vmatmul.mubr.f32.gmra.mxu0 %v1257
    %v1391 = vpop.f32.mrf.mxu0
    %v1392 = vadd.f32 0.0, %v1391
    %v1393 = vpop.f32.mrf.mxu0
    %1394 = vmatprep.mubr.f32.mxu0 0.0
    %1395 = vmatmul.mubr.f32.gmra.mxu0 %v1258
    %v1396 = vpop.f32.mrf.mxu0
    %v1397 = vadd.f32 0.0, %v1396
    %v1398 = vpop.f32.mrf.mxu0
    %1399 = vmatprep.mubr.f32.mxu0 0.0
    %1400 = vmatmul.mubr.f32.gmra.mxu0 %v1259
    %v1401 = vpop.f32.mrf.mxu0
    %v1402 = vadd.f32 0.0, %v1401
    %v1403 = vpop.f32.mrf.mxu0
    %1404 = vmatprep.mubr.f32.mxu0 0.0
    %1405 = vmatmul.mubr.f32.gmra.mxu0 %v1260
    %v1406 = vpop.f32.mrf.mxu0
    %v1407 = vadd.f32 0.0, %v1406
    %v1408 = vpop.f32.mrf.mxu0
    %1409 = vmatprep.mubr.f32.mxu0 0.0
    %1410 = vmatmul.mubr.f32.gmra.mxu0 %v1261
    %v1411 = vpop.f32.mrf.mxu0
    %v1412 = vadd.f32 0.0, %v1411
    %v1413 = vpop.f32.mrf.mxu0
    %1414 = vmatprep.mubr.f32.mxu0 0.0
    %1415 = vmatmul.mubr.f32.gmra.mxu0 %v1262
    %v1416 = vpop.f32.mrf.mxu0
    %v1417 = vadd.f32 0.0, %v1416
    %v1418 = vpop.f32.mrf.mxu0
    %1419 = vmatprep.mubr.f32.mxu0 0.0
    %1420 = vmatmul.mubr.f32.gmra.mxu0 %v1263
    %v1421 = vpop.f32.mrf.mxu0
    %v1422 = vadd.f32 0.0, %v1421
    %v1423 = vpop.f32.mrf.mxu0
    %1424 = vmatprep.mubr.f32.mxu0 0.0
    %1425 = vmatmul.mubr.f32.gmra.mxu0 %v1264
    %v1426 = vpop.f32.mrf.mxu0
    %v1427 = vadd.f32 0.0, %v1426
    %v1428 = vpop.f32.mrf.mxu0
    %1429 = vmatprep.mubr.f32.mxu0 0.0
    %1430 = vmatmul.mubr.f32.gmra.mxu0 %v1265
    %v1431 = vpop.f32.mrf.mxu0
    %v1432 = vadd.f32 0.0, %v1431
    %v1433 = vpop.f32.mrf.mxu0
    %1434 = vmatprep.mubr.f32.mxu0 0.0
    %1435 = vmatmul.mubr.f32.gmra.mxu0 %v1266
    %v1436 = vpop.f32.mrf.mxu0
    %v1437 = vadd.f32 0.0, %v1436
    %v1438 = vpop.f32.mrf.mxu0
    %1439 = vmatprep.mubr.f32.mxu0 0.0
    %1440 = vmatmul.mubr.f32.gmra.mxu0 %v1267
    %v1441 = vpop.f32.mrf.mxu0
    %v1442 = vadd.f32 0.0, %v1441
    %v1443 = vpop.f32.mrf.mxu0
    %1444 = vmatprep.mubr.f32.mxu0 0.0
    %1445 = vmatmul.mubr.f32.gmra.mxu0 %v1268
    %v1446 = vpop.f32.mrf.mxu0
    %v1447 = vadd.f32 0.0, %v1446
    %v1448 = vpop.f32.mrf.mxu0
    %1449 = vmatprep.mubr.f32.mxu0 0.0
    %1450 = vmatmul.mubr.f32.gmra.mxu0 %v1269
    %v1451 = vpop.f32.mrf.mxu0
    %v1452 = vadd.f32 0.0, %v1451
    %v1453 = vpop.f32.mrf.mxu0
    %1454 = vmatprep.mubr.f32.mxu0 0.0
    %1455 = vmatmul.mubr.f32.gmra.mxu0 %v1270
    %v1456 = vpop.f32.mrf.mxu0
    %v1457 = vadd.f32 0.0, %v1456
    %v1458 = vpop.f32.mrf.mxu0
    %1459 = vmatprep.mubr.f32.mxu0 0.0
    %1460 = vmatmul.mubr.f32.gmra.mxu0 %v1271
    %v1461 = vpop.f32.mrf.mxu0
    %v1462 = vadd.f32 0.0, %v1461
    %v1463 = vpop.f32.mrf.mxu0
    %1464 = vmatprep.mubr.f32.mxu0 0.0
    %1465 = vmatmul.mubr.f32.gmra.mxu0 %v1272
    %v1466 = vpop.f32.mrf.mxu0
    %v1467 = vadd.f32 0.0, %v1466
    %v1468 = vpop.f32.mrf.mxu0
    %1469 = vmatprep.mubr.f32.mxu0 0.0
    %1470 = vmatmul.mubr.f32.gmra.mxu0 %v1273
    %v1471 = vpop.f32.mrf.mxu0
    %v1472 = vadd.f32 0.0, %v1471
    %v1473 = vpop.f32.mrf.mxu0
    %1474 = vmatprep.mubr.f32.mxu0 0.0
    %1475 = vmatmul.mubr.f32.gmra.mxu0 %v1274
    %v1476 = vpop.f32.mrf.mxu0
    %v1477 = vadd.f32 0.0, %v1476
    %v1478 = vpop.f32.mrf.mxu0
    %1479 = vmatprep.mubr.f32.mxu0 0.0
    %1480 = vmatmul.mubr.f32.gmra.mxu0 %v1275
    %v1481 = vpop.f32.mrf.mxu0
    %v1482 = vadd.f32 0.0, %v1481
    %v1483 = vpop.f32.mrf.mxu0
    %1484 = vmatprep.mubr.f32.mxu0 0.0
    %1485 = vmatmul.mubr.f32.gmra.mxu0 %v1276
    %v1486 = vpop.f32.mrf.mxu0
    %v1487 = vadd.f32 0.0, %v1486
    %v1488 = vpop.f32.mrf.mxu0
    %1489 = vmatprep.mubr.f32.mxu0 0.0
    %1490 = vmatmul.mubr.f32.gmra.mxu0 %v1277
    %v1491 = vpop.f32.mrf.mxu0
    %v1492 = vadd.f32 0.0, %v1491
    %v1493 = vpop.f32.mrf.mxu0
    %1494 = vmatprep.mubr.f32.mxu0 0.0
    %1495 = vmatmul.mubr.f32.gmra.mxu0 %v1278
    %v1496 = vpop.f32.mrf.mxu0
    %v1497 = vadd.f32 0.0, %v1496
    %v1498 = vpop.f32.mrf.mxu0
    %1499 = vmatprep.mubr.f32.mxu0 0.0
    %1500 = vmatmul.mubr.f32.gmra.mxu0 %v1279
    %v1501 = vpop.f32.mrf.mxu0
    %v1502 = vadd.f32 0.0, %v1501
    %v1503 = vpop.f32.mrf.mxu0
    %1504 = vdwg.mxu0
    %vm1505 = vcmp.gt.f32.partialorder %v1347, 0.0
    %vm1506 = vcmp.gt.f32.partialorder %v1352, 0.0
    %vm1507 = vcmp.gt.f32.partialorder %v1357, 0.0
    %vm1508 = vcmp.gt.f32.partialorder %v1362, 0.0
    %vm1509 = vcmp.gt.f32.partialorder %v1367, 0.0
    %vm1510 = vcmp.gt.f32.partialorder %v1372, 0.0
    %vm1511 = vcmp.gt.f32.partialorder %v1377, 0.0
    %vm1512 = vcmp.gt.f32.partialorder %v1382, 0.0
    %vm1513 = vcmp.gt.f32.partialorder %v1387, 0.0
    %vm1514 = vcmp.gt.f32.partialorder %v1392, 0.0
    %vm1515 = vcmp.gt.f32.partialorder %v1397, 0.0
    %vm1516 = vcmp.gt.f32.partialorder %v1402, 0.0
    %vm1517 = vcmp.gt.f32.partialorder %v1407, 0.0
    %vm1518 = vcmp.gt.f32.partialorder %v1412, 0.0
    %vm1519 = vcmp.gt.f32.partialorder %v1417, 0.0
    %vm1520 = vcmp.gt.f32.partialorder %v1422, 0.0
    %vm1521 = vcmp.gt.f32.partialorder %v1427, 0.0
    %vm1522 = vcmp.gt.f32.partialorder %v1432, 0.0
    %vm1523 = vcmp.gt.f32.partialorder %v1437, 0.0
    %vm1524 = vcmp.gt.f32.partialorder %v1442, 0.0
    %vm1525 = vcmp.gt.f32.partialorder %v1447, 0.0
    %vm1526 = vcmp.gt.f32.partialorder %v1452, 0.0
    %vm1527 = vcmp.gt.f32.partialorder %v1457, 0.0
    %vm1528 = vcmp.gt.f32.partialorder %v1462, 0.0
    %vm1529 = vcmp.gt.f32.partialorder %v1467, 0.0
    %vm1530 = vcmp.gt.f32.partialorder %v1472, 0.0
    %vm1531 = vcmp.gt.f32.partialorder %v1477, 0.0
    %vm1532 = vcmp.gt.f32.partialorder %v1482, 0.0
    %vm1533 = vcmp.gt.f32.partialorder %v1487, 0.0
    %vm1534 = vcmp.gt.f32.partialorder %v1492, 0.0
    %vm1535 = vcmp.gt.f32.partialorder %v1497, 0.0
    %vm1536 = vcmp.gt.f32.partialorder %v1502, 0.0
    %v1537 = vmul.f32 %v1347, 0.2
    %v1538 = vmul.f32 %v1352, 0.2
    %v1539 = vmul.f32 %v1357, 0.2
    %v1540 = vmul.f32 %v1362, 0.2
    %v1541 = vmul.f32 %v1367, 0.2
    %v1542 = vmul.f32 %v1372, 0.2
    %v1543 = vmul.f32 %v1377, 0.2
    %v1544 = vmul.f32 %v1382, 0.2
    %v1545 = vmul.f32 %v1387, 0.2
    %v1546 = vmul.f32 %v1392, 0.2
    %v1547 = vmul.f32 %v1397, 0.2
    %v1548 = vmul.f32 %v1402, 0.2
    %v1549 = vmul.f32 %v1407, 0.2
    %v1550 = vmul.f32 %v1412, 0.2
    %v1551 = vmul.f32 %v1417, 0.2
    %v1552 = vmul.f32 %v1422, 0.2
    %v1553 = vmul.f32 %v1427, 0.2
    %v1554 = vmul.f32 %v1432, 0.2
    %v1555 = vmul.f32 %v1437, 0.2
    %v1556 = vmul.f32 %v1442, 0.2
    %v1557 = vmul.f32 %v1447, 0.2
    %v1558 = vmul.f32 %v1452, 0.2
    %v1559 = vmul.f32 %v1457, 0.2
    %v1560 = vmul.f32 %v1462, 0.2
    %v1561 = vmul.f32 %v1467, 0.2
    %v1562 = vmul.f32 %v1472, 0.2
    %v1563 = vmul.f32 %v1477, 0.2
    %v1564 = vmul.f32 %v1482, 0.2
    %v1565 = vmul.f32 %v1487, 0.2
    %v1566 = vmul.f32 %v1492, 0.2
    %v1567 = vmul.f32 %v1497, 0.2
    %v1568 = vmul.f32 %v1502, 0.2
    %v1569 = vsel %vm1505, %v1347, %v1537
    %v1570 = vsel %vm1506, %v1352, %v1538
    %v1571 = vsel %vm1507, %v1357, %v1539
    %v1572 = vsel %vm1508, %v1362, %v1540
    %v1573 = vsel %vm1509, %v1367, %v1541
    %v1574 = vsel %vm1510, %v1372, %v1542
    %v1575 = vsel %vm1511, %v1377, %v1543
    %v1576 = vsel %vm1512, %v1382, %v1544
    %v1577 = vsel %vm1513, %v1387, %v1545
    %v1578 = vsel %vm1514, %v1392, %v1546
    %v1579 = vsel %vm1515, %v1397, %v1547
    %v1580 = vsel %vm1516, %v1402, %v1548
    %v1581 = vsel %vm1517, %v1407, %v1549
    %v1582 = vsel %vm1518, %v1412, %v1550
    %v1583 = vsel %vm1519, %v1417, %v1551
    %v1584 = vsel %vm1520, %v1422, %v1552
    %v1585 = vsel %vm1521, %v1427, %v1553
    %v1586 = vsel %vm1522, %v1432, %v1554
    %v1587 = vsel %vm1523, %v1437, %v1555
    %v1588 = vsel %vm1524, %v1442, %v1556
    %v1589 = vsel %vm1525, %v1447, %v1557
    %v1590 = vsel %vm1526, %v1452, %v1558
    %v1591 = vsel %vm1527, %v1457, %v1559
    %v1592 = vsel %vm1528, %v1462, %v1560
    %v1593 = vsel %vm1529, %v1467, %v1561
    %v1594 = vsel %vm1530, %v1472, %v1562
    %v1595 = vsel %vm1531, %v1477, %v1563
    %v1596 = vsel %vm1532, %v1482, %v1564
    %v1597 = vsel %vm1533, %v1487, %v1565
    %v1598 = vsel %vm1534, %v1492, %v1566
    %v1599 = vsel %vm1535, %v1497, %v1567
    %v1600 = vsel %vm1536, %v1502, %v1568
    %v1603 = vunpack.c.l.s4 1966171168
    %v1604 = vunpack.c.0.s8 %v1603
    %v1605 = vlaneseq
    %v1606 = vshrl.u32 %v1605, 7
    %v1607 = vsub.s32 %v1604, %v1606
    %v1608 = vrot.slane %v1243, %v1607
    %v1609 = vcombine.high %v1608, %v1608
    %v1611 = vunpack.c.l.s4 1966171168
    %v1612 = vunpack.c.0.s8 %v1611
    %v1613 = vlaneseq
    %v1614 = vshrl.u32 %v1613, 7
    %v1615 = vsub.s32 %v1612, %v1614
    %v1616 = vrot.slane %v1608, %v1615
    %v1618 = vunpack.c.l.s4 1966171168
    %v1619 = vunpack.c.0.s8 %v1618
    %v1620 = vlaneseq
    %v1621 = vshrl.u32 %v1620, 7
    %v1622 = vsub.s32 %v1619, %v1621
    %v1623 = vrot.slane %v1609, %v1622
    %v1624 = vlaneseq
    %v1625 = vshrl.u32 %v1624, 7
    %v1626 = vsub.s32 0, %v1625
    %v1627 = vrot.slane %v1616, %v1626
    %v1628 = vlaneseq
    %v1629 = vshrl.u32 %v1628, 7
    %v1630 = vsub.s32 0, %v1629
    %v1631 = vrot.slane %v1623, %v1630
    %v1634 = vmul.f32 %v1569, %v1627
    %v1635 = vmul.f32 %v1570, %v1627
    %v1636 = vmul.f32 %v1571, %v1627
    %v1637 = vmul.f32 %v1572, %v1627
    %v1638 = vmul.f32 %v1573, %v1627
    %v1639 = vmul.f32 %v1574, %v1627
    %v1640 = vmul.f32 %v1575, %v1627
    %v1641 = vmul.f32 %v1576, %v1627
    %v1642 = vmul.f32 %v1577, %v1627
    %v1643 = vmul.f32 %v1578, %v1627
    %v1644 = vmul.f32 %v1579, %v1627
    %v1645 = vmul.f32 %v1580, %v1627
    %v1646 = vmul.f32 %v1581, %v1627
    %v1647 = vmul.f32 %v1582, %v1627
    %v1648 = vmul.f32 %v1583, %v1627
    %v1649 = vmul.f32 %v1584, %v1627
    %v1650 = vmul.f32 %v1585, %v1631
    %v1651 = vmul.f32 %v1586, %v1631
    %v1652 = vmul.f32 %v1587, %v1631
    %v1653 = vmul.f32 %v1588, %v1631
    %v1654 = vmul.f32 %v1589, %v1631
    %v1655 = vmul.f32 %v1590, %v1631
    %v1656 = vmul.f32 %v1591, %v1631
    %v1657 = vmul.f32 %v1592, %v1631
    %v1658 = vmul.f32 %v1593, %v1631
    %v1659 = vmul.f32 %v1594, %v1631
    %v1660 = vmul.f32 %v1595, %v1631
    %v1661 = vmul.f32 %v1596, %v1631
    %v1662 = vmul.f32 %v1597, %v1631
    %v1663 = vmul.f32 %v1598, %v1631
    %v1664 = vmul.f32 %v1599, %v1631
    %v1665 = vmul.f32 %v1600, %v1631
    %v1666 = vsel %vm140, %v1634, 0.0
    %1667 = vadd.xlane.f32.xlu0 %v1666
    %v1668 = vpop.xlane.xlu0 %1667
    %v1669 = vsel %vm140, %v1635, 0.0
    %1670 = vadd.xlane.f32.xlu0 %v1669
    %v1671 = vpop.xlane.xlu0 %1670
    %v1672 = vsel %vm140, %v1636, 0.0
    %1673 = vadd.xlane.f32.xlu0 %v1672
    %v1674 = vpop.xlane.xlu0 %1673
    %v1675 = vsel %vm140, %v1637, 0.0
    %1676 = vadd.xlane.f32.xlu0 %v1675
    %v1677 = vpop.xlane.xlu0 %1676
    %v1678 = vsel %vm140, %v1638, 0.0
    %1679 = vadd.xlane.f32.xlu0 %v1678
    %v1680 = vpop.xlane.xlu0 %1679
    %v1681 = vsel %vm140, %v1639, 0.0
    %1682 = vadd.xlane.f32.xlu0 %v1681
    %v1683 = vpop.xlane.xlu0 %1682
    %v1684 = vsel %vm140, %v1640, 0.0
    %1685 = vadd.xlane.f32.xlu0 %v1684
    %v1686 = vpop.xlane.xlu0 %1685
    %v1687 = vsel %vm140, %v1641, 0.0
    %1688 = vadd.xlane.f32.xlu0 %v1687
    %v1689 = vpop.xlane.xlu0 %1688
    %v1690 = vsel %vm140, %v1642, 0.0
    %1691 = vadd.xlane.f32.xlu0 %v1690
    %v1692 = vpop.xlane.xlu0 %1691
    %v1693 = vsel %vm140, %v1643, 0.0
    %1694 = vadd.xlane.f32.xlu0 %v1693
    %v1695 = vpop.xlane.xlu0 %1694
    %v1696 = vsel %vm140, %v1644, 0.0
    %1697 = vadd.xlane.f32.xlu0 %v1696
    %v1698 = vpop.xlane.xlu0 %1697
    %v1699 = vsel %vm140, %v1645, 0.0
    %1700 = vadd.xlane.f32.xlu0 %v1699
    %v1701 = vpop.xlane.xlu0 %1700
    %v1702 = vsel %vm140, %v1646, 0.0
    %1703 = vadd.xlane.f32.xlu0 %v1702
    %v1704 = vpop.xlane.xlu0 %1703
    %v1705 = vsel %vm140, %v1647, 0.0
    %1706 = vadd.xlane.f32.xlu0 %v1705
    %v1707 = vpop.xlane.xlu0 %1706
    %v1708 = vsel %vm140, %v1648, 0.0
    %1709 = vadd.xlane.f32.xlu0 %v1708
    %v1710 = vpop.xlane.xlu0 %1709
    %v1711 = vsel %vm140, %v1649, 0.0
    %1712 = vadd.xlane.f32.xlu0 %v1711
    %v1713 = vpop.xlane.xlu0 %1712
    %v1714 = vsel %vm140, %v1650, 0.0
    %1715 = vadd.xlane.f32.xlu0 %v1714
    %v1716 = vpop.xlane.xlu0 %1715
    %v1717 = vsel %vm140, %v1651, 0.0
    %1718 = vadd.xlane.f32.xlu0 %v1717
    %v1719 = vpop.xlane.xlu0 %1718
    %v1720 = vsel %vm140, %v1652, 0.0
    %1721 = vadd.xlane.f32.xlu0 %v1720
    %v1722 = vpop.xlane.xlu0 %1721
    %v1723 = vsel %vm140, %v1653, 0.0
    %1724 = vadd.xlane.f32.xlu0 %v1723
    %v1725 = vpop.xlane.xlu0 %1724
    %v1726 = vsel %vm140, %v1654, 0.0
    %1727 = vadd.xlane.f32.xlu0 %v1726
    %v1728 = vpop.xlane.xlu0 %1727
    %v1729 = vsel %vm140, %v1655, 0.0
    %1730 = vadd.xlane.f32.xlu0 %v1729
    %v1731 = vpop.xlane.xlu0 %1730
    %v1732 = vsel %vm140, %v1656, 0.0
    %1733 = vadd.xlane.f32.xlu0 %v1732
    %v1734 = vpop.xlane.xlu0 %1733
    %v1735 = vsel %vm140, %v1657, 0.0
    %1736 = vadd.xlane.f32.xlu0 %v1735
    %v1737 = vpop.xlane.xlu0 %1736
    %v1738 = vsel %vm140, %v1658, 0.0
    %1739 = vadd.xlane.f32.xlu0 %v1738
    %v1740 = vpop.xlane.xlu0 %1739
    %v1741 = vsel %vm140, %v1659, 0.0
    %1742 = vadd.xlane.f32.xlu0 %v1741
    %v1743 = vpop.xlane.xlu0 %1742
    %v1744 = vsel %vm140, %v1660, 0.0
    %1745 = vadd.xlane.f32.xlu0 %v1744
    %v1746 = vpop.xlane.xlu0 %1745
    %v1747 = vsel %vm140, %v1661, 0.0
    %1748 = vadd.xlane.f32.xlu0 %v1747
    %v1749 = vpop.xlane.xlu0 %1748
    %v1750 = vsel %vm140, %v1662, 0.0
    %1751 = vadd.xlane.f32.xlu0 %v1750
    %v1752 = vpop.xlane.xlu0 %1751
    %v1753 = vsel %vm140, %v1663, 0.0
    %1754 = vadd.xlane.f32.xlu0 %v1753
    %v1755 = vpop.xlane.xlu0 %1754
    %v1756 = vsel %vm140, %v1664, 0.0
    %1757 = vadd.xlane.f32.xlu0 %v1756
    %v1758 = vpop.xlane.xlu0 %1757
    %v1759 = vsel %vm140, %v1665, 0.0
    %1760 = vadd.xlane.f32.xlu0 %v1759
    %v1761 = vpop.xlane.xlu0 %1760
    %v1762 = vmul.f32 %v993, %v993
    %v1763 = vmul.f32 %v994, %v994
    %v1796 = vlaneseq
    %v1797 = vshrl.u32 %v1796, 7
    %v1798 = vsub.s32 %v240, %v1797
    %v1799 = vrot.slane %v1668, %v1798
    %v1800 = vadd.s32 %v240, 4294967288
    %v1801 = vlaneseq
    %v1802 = vshrl.u32 %v1801, 7
    %v1803 = vsub.s32 %v1800, %v1802
    %v1804 = vrot.slane %v1671, %v1803
    %vm1805 = vcmask 130112
    %v1806 = vsel %vm1805, %v1804, %v1799
    %v1807 = vadd.s32 %v240, 4294967280
    %v1808 = vlaneseq
    %v1809 = vshrl.u32 %v1808, 7
    %v1810 = vsub.s32 %v1807, %v1809
    %v1811 = vrot.slane %v1674, %v1810
    %vm1812 = vcmask 195712
    %v1813 = vsel %vm1812, %v1811, %v1806
    %v1814 = vadd.s32 %v240, 4294967272
    %v1815 = vlaneseq
    %v1816 = vshrl.u32 %v1815, 7
    %v1817 = vsub.s32 %v1814, %v1816
    %v1818 = vrot.slane %v1677, %v1817
    %vm1819 = vcmask 261312
    %v1820 = vsel %vm1819, %v1818, %v1813
    %v1821 = vadd.s32 %v240, 4294967264
    %v1822 = vlaneseq
    %v1823 = vshrl.u32 %v1822, 7
    %v1824 = vsub.s32 %v1821, %v1823
    %v1825 = vrot.slane %v1680, %v1824
    %vm1826 = vcmask 326912
    %v1827 = vsel %vm1826, %v1825, %v1820
    %v1828 = vadd.s32 %v240, 4294967256
    %v1829 = vlaneseq
    %v1830 = vshrl.u32 %v1829, 7
    %v1831 = vsub.s32 %v1828, %v1830
    %v1832 = vrot.slane %v1683, %v1831
    %vm1833 = vcmask 392512
    %v1834 = vsel %vm1833, %v1832, %v1827
    %v1835 = vadd.s32 %v240, 4294967248
    %v1836 = vlaneseq
    %v1837 = vshrl.u32 %v1836, 7
    %v1838 = vsub.s32 %v1835, %v1837
    %v1839 = vrot.slane %v1686, %v1838
    %vm1840 = vcmask 458112
    %v1841 = vsel %vm1840, %v1839, %v1834
    %v1842 = vadd.s32 %v240, 4294967240
    %v1843 = vlaneseq
    %v1844 = vshrl.u32 %v1843, 7
    %v1845 = vsub.s32 %v1842, %v1844
    %v1846 = vrot.slane %v1689, %v1845
    %vm1847 = vcmask 523712
    %v1848 = vsel %vm1847, %v1846, %v1841
    %v1849 = vadd.s32 %v240, 4294967232
    %v1850 = vlaneseq
    %v1851 = vshrl.u32 %v1850, 7
    %v1852 = vsub.s32 %v1849, %v1851
    %v1853 = vrot.slane %v1692, %v1852
    %vm1854 = vcmask 589312
    %v1855 = vsel %vm1854, %v1853, %v1848
    %v1856 = vadd.s32 %v240, 4294967224
    %v1857 = vlaneseq
    %v1858 = vshrl.u32 %v1857, 7
    %v1859 = vsub.s32 %v1856, %v1858
    %v1860 = vrot.slane %v1695, %v1859
    %vm1861 = vcmask 654912
    %v1862 = vsel %vm1861, %v1860, %v1855
    %v1863 = vadd.s32 %v240, 4294967216
    %v1864 = vlaneseq
    %v1865 = vshrl.u32 %v1864, 7
    %v1866 = vsub.s32 %v1863, %v1865
    %v1867 = vrot.slane %v1698, %v1866
    %vm1868 = vcmask 720512
    %v1869 = vsel %vm1868, %v1867, %v1862
    %v1870 = vadd.s32 %v240, 4294967208
    %v1871 = vlaneseq
    %v1872 = vshrl.u32 %v1871, 7
    %v1873 = vsub.s32 %v1870, %v1872
    %v1874 = vrot.slane %v1701, %v1873
    %vm1875 = vcmask 786112
    %v1876 = vsel %vm1875, %v1874, %v1869
    %v1877 = vadd.s32 %v240, 4294967200
    %v1878 = vlaneseq
    %v1879 = vshrl.u32 %v1878, 7
    %v1880 = vsub.s32 %v1877, %v1879
    %v1881 = vrot.slane %v1704, %v1880
    %vm1882 = vcmask 851712
    %v1883 = vsel %vm1882, %v1881, %v1876
    %v1884 = vadd.s32 %v240, 4294967192
    %v1885 = vlaneseq
    %v1886 = vshrl.u32 %v1885, 7
    %v1887 = vsub.s32 %v1884, %v1886
    %v1888 = vrot.slane %v1707, %v1887
    %vm1889 = vcmask 917312
    %v1890 = vsel %vm1889, %v1888, %v1883
    %v1891 = vadd.s32 %v240, 4294967184
    %v1892 = vlaneseq
    %v1893 = vshrl.u32 %v1892, 7
    %v1894 = vsub.s32 %v1891, %v1893
    %v1895 = vrot.slane %v1710, %v1894
    %vm1896 = vcmask 982912
    %v1897 = vsel %vm1896, %v1895, %v1890
    %v1898 = vadd.s32 %v240, 4294967176
    %v1899 = vlaneseq
    %v1900 = vshrl.u32 %v1899, 7
    %v1901 = vsub.s32 %v1898, %v1900
    %v1902 = vrot.slane %v1713, %v1901
    %vm1903 = vcmask 1048512
    %v1904 = vsel %vm1903, %v1902, %v1897
    %v1905 = vlaneseq
    %v1906 = vshrl.u32 %v1905, 7
    %v1907 = vsub.s32 %v240, %v1906
    %v1908 = vrot.slane %v1716, %v1907
    %v1909 = vlaneseq
    %v1910 = vshrl.u32 %v1909, 7
    %v1911 = vsub.s32 %v1800, %v1910
    %v1912 = vrot.slane %v1719, %v1911
    %v1913 = vsel %vm1805, %v1912, %v1908
    %v1914 = vlaneseq
    %v1915 = vshrl.u32 %v1914, 7
    %v1916 = vsub.s32 %v1807, %v1915
    %v1917 = vrot.slane %v1722, %v1916
    %v1918 = vsel %vm1812, %v1917, %v1913
    %v1919 = vlaneseq
    %v1920 = vshrl.u32 %v1919, 7
    %v1921 = vsub.s32 %v1814, %v1920
    %v1922 = vrot.slane %v1725, %v1921
    %v1923 = vsel %vm1819, %v1922, %v1918
    %v1924 = vlaneseq
    %v1925 = vshrl.u32 %v1924, 7
    %v1926 = vsub.s32 %v1821, %v1925
    %v1927 = vrot.slane %v1728, %v1926
    %v1928 = vsel %vm1826, %v1927, %v1923
    %v1929 = vlaneseq
    %v1930 = vshrl.u32 %v1929, 7
    %v1931 = vsub.s32 %v1828, %v1930
    %v1932 = vrot.slane %v1731, %v1931
    %v1933 = vsel %vm1833, %v1932, %v1928
    %v1934 = vlaneseq
    %v1935 = vshrl.u32 %v1934, 7
    %v1936 = vsub.s32 %v1835, %v1935
    %v1937 = vrot.slane %v1734, %v1936
    %v1938 = vsel %vm1840, %v1937, %v1933
    %v1939 = vlaneseq
    %v1940 = vshrl.u32 %v1939, 7
    %v1941 = vsub.s32 %v1842, %v1940
    %v1942 = vrot.slane %v1737, %v1941
    %v1943 = vsel %vm1847, %v1942, %v1938
    %v1944 = vlaneseq
    %v1945 = vshrl.u32 %v1944, 7
    %v1946 = vsub.s32 %v1849, %v1945
    %v1947 = vrot.slane %v1740, %v1946
    %v1948 = vsel %vm1854, %v1947, %v1943
    %v1949 = vlaneseq
    %v1950 = vshrl.u32 %v1949, 7
    %v1951 = vsub.s32 %v1856, %v1950
    %v1952 = vrot.slane %v1743, %v1951
    %v1953 = vsel %vm1861, %v1952, %v1948
    %v1954 = vlaneseq
    %v1955 = vshrl.u32 %v1954, 7
    %v1956 = vsub.s32 %v1863, %v1955
    %v1957 = vrot.slane %v1746, %v1956
    %v1958 = vsel %vm1868, %v1957, %v1953
    %v1959 = vlaneseq
    %v1960 = vshrl.u32 %v1959, 7
    %v1961 = vsub.s32 %v1870, %v1960
    %v1962 = vrot.slane %v1749, %v1961
    %v1963 = vsel %vm1875, %v1962, %v1958
    %v1964 = vlaneseq
    %v1965 = vshrl.u32 %v1964, 7
    %v1966 = vsub.s32 %v1877, %v1965
    %v1967 = vrot.slane %v1752, %v1966
    %v1968 = vsel %vm1882, %v1967, %v1963
    %v1969 = vlaneseq
    %v1970 = vshrl.u32 %v1969, 7
    %v1971 = vsub.s32 %v1884, %v1970
    %v1972 = vrot.slane %v1755, %v1971
    %v1973 = vsel %vm1889, %v1972, %v1968
    %v1974 = vlaneseq
    %v1975 = vshrl.u32 %v1974, 7
    %v1976 = vsub.s32 %v1891, %v1975
    %v1977 = vrot.slane %v1758, %v1976
    %v1978 = vsel %vm1896, %v1977, %v1973
    %v1979 = vlaneseq
    %v1980 = vshrl.u32 %v1979, 7
    %v1981 = vsub.s32 %v1898, %v1980
    %v1982 = vrot.slane %v1761, %v1981
    %v1983 = vsel %vm1903, %v1982, %v1978
    %v1986 = vmul.f32 %v1762, %v1904
    %v1987 = vmul.f32 %v1763, %v1983
    %v1988 = vlaneseq
    %v1989 = vshrl.u32 %v1988, 7
    %v1990 = vsub.s32 0, %v1989
    %v1991 = vrot.slane %v1986, %v1990
    %v1992 = vlaneseq
    %v1993 = vshrl.u32 %v1992, 7
    %v1994 = vsub.s32 0, %v1993
    %v1995 = vrot.slane %v1987, %v1994
    %v1996 = vmul.f32 %v887, %v1991
    %v1997 = vmul.f32 %v888, %v1991
    %v1998 = vmul.f32 %v889, %v1991
    %v1999 = vmul.f32 %v890, %v1991
    %v2000 = vmul.f32 %v891, %v1991
    %v2001 = vmul.f32 %v892, %v1991
    %v2002 = vmul.f32 %v893, %v1991
    %v2003 = vmul.f32 %v894, %v1991
    %v2004 = vmul.f32 %v895, %v1991
    %v2005 = vmul.f32 %v896, %v1991
    %v2006 = vmul.f32 %v897, %v1991
    %v2007 = vmul.f32 %v898, %v1991
    %v2008 = vmul.f32 %v899, %v1991
    %v2009 = vmul.f32 %v900, %v1991
    %v2010 = vmul.f32 %v901, %v1991
    %v2011 = vmul.f32 %v902, %v1991
    %v2012 = vmul.f32 %v903, %v1995
    %v2013 = vmul.f32 %v904, %v1995
    %v2014 = vmul.f32 %v905, %v1995
    %v2015 = vmul.f32 %v906, %v1995
    %v2016 = vmul.f32 %v907, %v1995
    %v2017 = vmul.f32 %v908, %v1995
    %v2018 = vmul.f32 %v909, %v1995
    %v2019 = vmul.f32 %v910, %v1995
    %v2020 = vmul.f32 %v911, %v1995
    %v2021 = vmul.f32 %v912, %v1995
    %v2022 = vmul.f32 %v913, %v1995
    %v2023 = vmul.f32 %v914, %v1995
    %v2024 = vmul.f32 %v915, %v1995
    %v2025 = vmul.f32 %v916, %v1995
    %v2026 = vmul.f32 %v917, %v1995
    %v2027 = vmul.f32 %v918, %v1995
    %2028 = vadd.xlane.f32.xlu0 %v1996
    %v2029 = vpop.xlane.xlu0 %2028
    %2030 = vadd.xlane.f32.xlu0 %v1997
    %v2031 = vpop.xlane.xlu0 %2030
    %2032 = vadd.xlane.f32.xlu0 %v1998
    %v2033 = vpop.xlane.xlu0 %2032
    %2034 = vadd.xlane.f32.xlu0 %v1999
    %v2035 = vpop.xlane.xlu0 %2034
    %2036 = vadd.xlane.f32.xlu0 %v2000
    %v2037 = vpop.xlane.xlu0 %2036
    %2038 = vadd.xlane.f32.xlu0 %v2001
    %v2039 = vpop.xlane.xlu0 %2038
    %2040 = vadd.xlane.f32.xlu0 %v2002
    %v2041 = vpop.xlane.xlu0 %2040
    %2042 = vadd.xlane.f32.xlu0 %v2003
    %v2043 = vpop.xlane.xlu0 %2042
    %2044 = vadd.xlane.f32.xlu0 %v2004
    %v2045 = vpop.xlane.xlu0 %2044
    %2046 = vadd.xlane.f32.xlu0 %v2005
    %v2047 = vpop.xlane.xlu0 %2046
    %2048 = vadd.xlane.f32.xlu0 %v2006
    %v2049 = vpop.xlane.xlu0 %2048
    %2050 = vadd.xlane.f32.xlu0 %v2007
    %v2051 = vpop.xlane.xlu0 %2050
    %2052 = vadd.xlane.f32.xlu0 %v2008
    %v2053 = vpop.xlane.xlu0 %2052
    %2054 = vadd.xlane.f32.xlu0 %v2009
    %v2055 = vpop.xlane.xlu0 %2054
    %2056 = vadd.xlane.f32.xlu0 %v2010
    %v2057 = vpop.xlane.xlu0 %2056
    %2058 = vadd.xlane.f32.xlu0 %v2011
    %v2059 = vpop.xlane.xlu0 %2058
    %2060 = vadd.xlane.f32.xlu0 %v2012
    %v2061 = vpop.xlane.xlu0 %2060
    %2062 = vadd.xlane.f32.xlu0 %v2013
    %v2063 = vpop.xlane.xlu0 %2062
    %2064 = vadd.xlane.f32.xlu0 %v2014
    %v2065 = vpop.xlane.xlu0 %2064
    %2066 = vadd.xlane.f32.xlu0 %v2015
    %v2067 = vpop.xlane.xlu0 %2066
    %2068 = vadd.xlane.f32.xlu0 %v2016
    %v2069 = vpop.xlane.xlu0 %2068
    %2070 = vadd.xlane.f32.xlu0 %v2017
    %v2071 = vpop.xlane.xlu0 %2070
    %2072 = vadd.xlane.f32.xlu0 %v2018
    %v2073 = vpop.xlane.xlu0 %2072
    %2074 = vadd.xlane.f32.xlu0 %v2019
    %v2075 = vpop.xlane.xlu0 %2074
    %2076 = vadd.xlane.f32.xlu0 %v2020
    %v2077 = vpop.xlane.xlu0 %2076
    %2078 = vadd.xlane.f32.xlu0 %v2021
    %v2079 = vpop.xlane.xlu0 %2078
    %2080 = vadd.xlane.f32.xlu0 %v2022
    %v2081 = vpop.xlane.xlu0 %2080
    %2082 = vadd.xlane.f32.xlu0 %v2023
    %v2083 = vpop.xlane.xlu0 %2082
    %2084 = vadd.xlane.f32.xlu0 %v2024
    %v2085 = vpop.xlane.xlu0 %2084
    %2086 = vadd.xlane.f32.xlu0 %v2025
    %v2087 = vpop.xlane.xlu0 %2086
    %2088 = vadd.xlane.f32.xlu0 %v2026
    %v2089 = vpop.xlane.xlu0 %2088
    %2090 = vadd.xlane.f32.xlu0 %v2027
    %v2091 = vpop.xlane.xlu0 %2090
    %v2124 = vlaneseq
    %v2125 = vshrl.u32 %v2124, 7
    %v2126 = vsub.s32 %v240, %v2125
    %v2127 = vrot.slane %v2029, %v2126
    %v2128 = vlaneseq
    %v2129 = vshrl.u32 %v2128, 7
    %v2130 = vsub.s32 %v1800, %v2129
    %v2131 = vrot.slane %v2031, %v2130
    %v2132 = vsel %vm1805, %v2131, %v2127
    %v2133 = vlaneseq
    %v2134 = vshrl.u32 %v2133, 7
    %v2135 = vsub.s32 %v1807, %v2134
    %v2136 = vrot.slane %v2033, %v2135
    %v2137 = vsel %vm1812, %v2136, %v2132
    %v2138 = vlaneseq
    %v2139 = vshrl.u32 %v2138, 7
    %v2140 = vsub.s32 %v1814, %v2139
    %v2141 = vrot.slane %v2035, %v2140
    %v2142 = vsel %vm1819, %v2141, %v2137
    %v2143 = vlaneseq
    %v2144 = vshrl.u32 %v2143, 7
    %v2145 = vsub.s32 %v1821, %v2144
    %v2146 = vrot.slane %v2037, %v2145
    %v2147 = vsel %vm1826, %v2146, %v2142
    %v2148 = vlaneseq
    %v2149 = vshrl.u32 %v2148, 7
    %v2150 = vsub.s32 %v1828, %v2149
    %v2151 = vrot.slane %v2039, %v2150
    %v2152 = vsel %vm1833, %v2151, %v2147
    %v2153 = vlaneseq
    %v2154 = vshrl.u32 %v2153, 7
    %v2155 = vsub.s32 %v1835, %v2154
    %v2156 = vrot.slane %v2041, %v2155
    %v2157 = vsel %vm1840, %v2156, %v2152
    %v2158 = vlaneseq
    %v2159 = vshrl.u32 %v2158, 7
    %v2160 = vsub.s32 %v1842, %v2159
    %v2161 = vrot.slane %v2043, %v2160
    %v2162 = vsel %vm1847, %v2161, %v2157
    %v2163 = vlaneseq
    %v2164 = vshrl.u32 %v2163, 7
    %v2165 = vsub.s32 %v1849, %v2164
    %v2166 = vrot.slane %v2045, %v2165
    %v2167 = vsel %vm1854, %v2166, %v2162
    %v2168 = vlaneseq
    %v2169 = vshrl.u32 %v2168, 7
    %v2170 = vsub.s32 %v1856, %v2169
    %v2171 = vrot.slane %v2047, %v2170
    %v2172 = vsel %vm1861, %v2171, %v2167
    %v2173 = vlaneseq
    %v2174 = vshrl.u32 %v2173, 7
    %v2175 = vsub.s32 %v1863, %v2174
    %v2176 = vrot.slane %v2049, %v2175
    %v2177 = vsel %vm1868, %v2176, %v2172
    %v2178 = vlaneseq
    %v2179 = vshrl.u32 %v2178, 7
    %v2180 = vsub.s32 %v1870, %v2179
    %v2181 = vrot.slane %v2051, %v2180
    %v2182 = vsel %vm1875, %v2181, %v2177
    %v2183 = vlaneseq
    %v2184 = vshrl.u32 %v2183, 7
    %v2185 = vsub.s32 %v1877, %v2184
    %v2186 = vrot.slane %v2053, %v2185
    %v2187 = vsel %vm1882, %v2186, %v2182
    %v2188 = vlaneseq
    %v2189 = vshrl.u32 %v2188, 7
    %v2190 = vsub.s32 %v1884, %v2189
    %v2191 = vrot.slane %v2055, %v2190
    %v2192 = vsel %vm1889, %v2191, %v2187
    %v2193 = vlaneseq
    %v2194 = vshrl.u32 %v2193, 7
    %v2195 = vsub.s32 %v1891, %v2194
    %v2196 = vrot.slane %v2057, %v2195
    %v2197 = vsel %vm1896, %v2196, %v2192
    %v2198 = vlaneseq
    %v2199 = vshrl.u32 %v2198, 7
    %v2200 = vsub.s32 %v1898, %v2199
    %v2201 = vrot.slane %v2059, %v2200
    %v2202 = vsel %vm1903, %v2201, %v2197
    %v2203 = vlaneseq
    %v2204 = vshrl.u32 %v2203, 7
    %v2205 = vsub.s32 %v240, %v2204
    %v2206 = vrot.slane %v2061, %v2205
    %v2207 = vlaneseq
    %v2208 = vshrl.u32 %v2207, 7
    %v2209 = vsub.s32 %v1800, %v2208
    %v2210 = vrot.slane %v2063, %v2209
    %v2211 = vsel %vm1805, %v2210, %v2206
    %v2212 = vlaneseq
    %v2213 = vshrl.u32 %v2212, 7
    %v2214 = vsub.s32 %v1807, %v2213
    %v2215 = vrot.slane %v2065, %v2214
    %v2216 = vsel %vm1812, %v2215, %v2211
    %v2217 = vlaneseq
    %v2218 = vshrl.u32 %v2217, 7
    %v2219 = vsub.s32 %v1814, %v2218
    %v2220 = vrot.slane %v2067, %v2219
    %v2221 = vsel %vm1819, %v2220, %v2216
    %v2222 = vlaneseq
    %v2223 = vshrl.u32 %v2222, 7
    %v2224 = vsub.s32 %v1821, %v2223
    %v2225 = vrot.slane %v2069, %v2224
    %v2226 = vsel %vm1826, %v2225, %v2221
    %v2227 = vlaneseq
    %v2228 = vshrl.u32 %v2227, 7
    %v2229 = vsub.s32 %v1828, %v2228
    %v2230 = vrot.slane %v2071, %v2229
    %v2231 = vsel %vm1833, %v2230, %v2226
    %v2232 = vlaneseq
    %v2233 = vshrl.u32 %v2232, 7
    %v2234 = vsub.s32 %v1835, %v2233
    %v2235 = vrot.slane %v2073, %v2234
    %v2236 = vsel %vm1840, %v2235, %v2231
    %v2237 = vlaneseq
    %v2238 = vshrl.u32 %v2237, 7
    %v2239 = vsub.s32 %v1842, %v2238
    %v2240 = vrot.slane %v2075, %v2239
    %v2241 = vsel %vm1847, %v2240, %v2236
    %v2242 = vlaneseq
    %v2243 = vshrl.u32 %v2242, 7
    %v2244 = vsub.s32 %v1849, %v2243
    %v2245 = vrot.slane %v2077, %v2244
    %v2246 = vsel %vm1854, %v2245, %v2241
    %v2247 = vlaneseq
    %v2248 = vshrl.u32 %v2247, 7
    %v2249 = vsub.s32 %v1856, %v2248
    %v2250 = vrot.slane %v2079, %v2249
    %v2251 = vsel %vm1861, %v2250, %v2246
    %v2252 = vlaneseq
    %v2253 = vshrl.u32 %v2252, 7
    %v2254 = vsub.s32 %v1863, %v2253
    %v2255 = vrot.slane %v2081, %v2254
    %v2256 = vsel %vm1868, %v2255, %v2251
    %v2257 = vlaneseq
    %v2258 = vshrl.u32 %v2257, 7
    %v2259 = vsub.s32 %v1870, %v2258
    %v2260 = vrot.slane %v2083, %v2259
    %v2261 = vsel %vm1875, %v2260, %v2256
    %v2262 = vlaneseq
    %v2263 = vshrl.u32 %v2262, 7
    %v2264 = vsub.s32 %v1877, %v2263
    %v2265 = vrot.slane %v2085, %v2264
    %v2266 = vsel %vm1882, %v2265, %v2261
    %v2267 = vlaneseq
    %v2268 = vshrl.u32 %v2267, 7
    %v2269 = vsub.s32 %v1884, %v2268
    %v2270 = vrot.slane %v2087, %v2269
    %v2271 = vsel %vm1889, %v2270, %v2266
    %v2272 = vlaneseq
    %v2273 = vshrl.u32 %v2272, 7
    %v2274 = vsub.s32 %v1891, %v2273
    %v2275 = vrot.slane %v2089, %v2274
    %v2276 = vsel %vm1896, %v2275, %v2271
    %v2277 = vlaneseq
    %v2278 = vshrl.u32 %v2277, 7
    %v2279 = vsub.s32 %v1898, %v2278
    %v2280 = vrot.slane %v2091, %v2279
    %v2281 = vsel %vm1903, %v2280, %v2276
    %v2284 = vmul.f32 %v993, %v2202
    %v2285 = vmul.f32 %v994, %v2281
    %v2288 = vrot.slane %v2285, 7
    %v2289 = vsel %vm165, %v2288, %v2284
    %2291 = vst [vmem:[#allocation2] sm:$0x3] %v2289
    // Predicated region
    $region34: #{salgl_forward.1} parent=1 // pred_check
      _
    $region35: #{salgl_forward.1} parent=1 // pred_check_branch
      %2293 = sbr.rel (0) target = $region37
    $region36: #{salgl_forward.1} parent=1 // pred_region
      _
    $region37: #{salgl_forward.1} parent=1 // pred_fallthru
      _
    // Predicated region
    $region38: #{salgl_forward.1} parent=1 // pred_check
      _
    $region39: #{salgl_forward.1} parent=1 // pred_check_branch
      %2295 = sbr.rel (0) target = $region41
    $region40: #{salgl_forward.1} parent=1 // pred_region
      _
    $region41: #{salgl_forward.1} parent=1 // pred_fallthru
      _
    // Predicated region
    $region42: #{salgl_forward.1} parent=1 // pred_check
      _
    $region43: #{salgl_forward.1} parent=1 // pred_check_branch
      %2297 = sbr.rel (0) target = $region45
    $region44: #{salgl_forward.1} parent=1 // pred_region
      %s2299 = ssub.s32 32, 32
      %2300 = vsyncadd [#allocation3], %s2299
      %s2302 = sshll.u32 [#allocation2], 4
      %s2303 = int_to_ptr.vmem [resolvable:$true] %s2302
      %2305 = dma.vmem_to_hbm [thread:$0]  %s2303, 32, %s10, [#allocation3]
    $region45: #{salgl_forward.1} parent=1 // pred_fallthru
      _
    // Predicated region
    $region46: #{salgl_forward.1} parent=1 // pred_check
      _
    $region47: #{salgl_forward.1} parent=1 // pred_check_branch
      %2307 = sbr.rel (0) target = $region49
    $region48: #{salgl_forward.1} parent=1 // pred_region
      _
    $region49: #{salgl_forward.1} parent=1 // pred_fallthru
      _
    // Predicated region
    $region50: #{salgl_forward.1} parent=1 // pred_check
      _
    $region51: #{salgl_forward.1} parent=1 // pred_check_branch
      %2309 = sbr.rel (0) target = $region53
    $region52: #{salgl_forward.1} parent=1 // pred_region
      _
    $region53: #{salgl_forward.1} parent=1 // pred_fallthru
      _
    // Predicated region
    $region54: #{salgl_forward.1} parent=1 // pred_check
      _
    $region55: #{salgl_forward.1} parent=1 // pred_check_branch
      %2311 = sbr.rel (0) target = $region57
    $region56: #{salgl_forward.1} parent=1 // pred_region
      %2312 = dma.done [#allocation3], 32
    $region57: #{salgl_forward.1} parent=1 // pred_fallthru
      _
    %2313 = vsyncpa [#allocation3], 1

</llo_original>
